<compile_context>
chip_gen: v7x
topology: tpu7x:2x2x1
jax: 0.10.0
libtpu: 0.0.40
codegen_flags: <defaults>
</compile_context>

<pallas_src>
import math

import jax
import jax.numpy as jnp
import numpy as np
from jax.experimental import pallas as pl
from jax.experimental.pallas import tpu as pltpu

BN_EPS = 1e-5

# Network config (standard Omniglot-style Learner, scaled small):
#   conv2d: [ch_out, ch_in, kh, kw, stride, padding] ; bn: [ch] ; linear: [out, in]
CONFIG = [
    ('conv2d', [8, 1, 3, 3, 2, 0]),
    ('relu',   [True]),
    ('bn',     [8]),
    ('conv2d', [8, 8, 3, 3, 2, 0]),
    ('relu',   [True]),
    ('bn',     [8]),
    ('conv2d', [8, 8, 3, 3, 2, 0]),
    ('relu',   [True]),
    ('bn',     [8]),
    ('conv2d', [8, 8, 2, 2, 1, 0]),
    ('relu',   [True]),
    ('bn',     [8]),
    ('flatten', []),
    ('linear', [5, 8]),
]


# ---------------------------------------------------------------------------
# Config parsing / geometry
# ---------------------------------------------------------------------------
def parse_config(config):
    """Split the config into fused conv blocks (conv [+relu] [+bn]) + linear."""
    blocks, linear = [], None
    i, n_params = 0, 0
    while i < len(config):
        name, param = config[i]
        if name == 'conv2d':
            blk = dict(cout=param[0], cin=param[1], kh=param[2], kw=param[3],
                       stride=param[4], pad=param[5], w_idx=n_params,
                       relu=False, bn=False, bn_idx=None)
            n_params += 2
            j = i + 1
            if j < len(config) and config[j][0] == 'relu':
                blk['relu'] = True
                j += 1
            if j < len(config) and config[j][0] == 'bn':
                blk['bn'] = True
                blk['bn_idx'] = n_params
                n_params += 2
                j += 1
            blocks.append(blk)
            i = j
        elif name == 'flatten':
            i += 1
        elif name == 'linear':
            linear = dict(out=param[0], inp=param[1], w_idx=n_params)
            n_params += 2
            i += 1
        else:
            # TODO(synk): standalone tanh/sigmoid/pool/upsample/convt2d entries
            # of the generic Learner config are not used by this network.
            raise NotImplementedError(name)
    assert linear is not None
    return blocks, linear, n_params


def make_gather_wide(H, W, KH, KW, stride, pad, OH, OW):
    """Batch-independent one-hot gather matrix [H*W, KT*OH*OW], columns ordered
    (tap, oh, ow).  All-zero columns give implicit zero padding.  Entries are
    {0, 1}, so bf16 storage is exact."""
    KT, S = KH * KW, OH * OW
    G = np.zeros((H * W, KT * S), np.float32)
    for kh in range(KH):
        for kw in range(KW):
            t = kh * KW + kw
            for oh in range(OH):
                ih = oh * stride + kh - pad
                if not (0 <= ih < H):
                    continue
                for ow in range(OW):
                    iw = ow * stride + kw - pad
                    if not (0 <= iw < W):
                        continue
                    G[ih * W + iw, t * S + oh * OW + ow] = 1.0
    return G


# ---------------------------------------------------------------------------
# Single fused Pallas kernel
# ---------------------------------------------------------------------------
def build_kernel(blocks, B):
    n_gather = len(blocks) - 1

    def kernel(*refs):
        # refs: p1, w1, (g_wide, wflat) * n_gather, cp, wlin, blin, o_ref
        p1_ref, w1_ref = refs[0], refs[1]
        pos = 2
        gw = []
        for _ in range(n_gather):
            gw.append((refs[pos], refs[pos + 1]))
            pos += 2
        cp_ref, wlin_ref, blin_ref = refs[pos], refs[pos + 1], refs[pos + 2]
        o_ref = refs[pos + 3]

        def epilogue(y, blk_idx, blk):
            # f32 epilogue: conv bias -> relu -> batch-norm with two-pass batch
            # statistics over the lane axis (= N*OH*OW), biased variance,
            # matching F.batch_norm(training=True).
            cout = blk['cout']
            cp = cp_ref[blk_idx]                                # [max_c, 3]
            y = y + cp[:cout, 0:1]                              # conv bias
            if blk['relu']:
                y = jnp.maximum(y, 0.0)
            if blk['bn']:
                inv_n = 1.0 / y.shape[1]
                mean = jnp.sum(y, axis=1, keepdims=True) * inv_n
                d = y - mean
                var = jnp.sum(d * d, axis=1, keepdims=True) * inv_n
                y = d * jax.lax.rsqrt(var + BN_EPS)
                y = y * cp[:cout, 1:2] + cp[:cout, 2:3]
            return y

        # ---- block 0: host-side im2col (Cin=1) -> single bf16 MXU matmul ----
        a = jnp.dot(w1_ref[...], p1_ref[...], preferred_element_type=jnp.float32)
        a = epilogue(a, 0, blocks[0])

        # ---- blocks 1..: per-sample wide gather matmul + fused conv matmul --
        for bi, blk in enumerate(blocks[1:], start=1):
            g_ref, wf_ref = gw[bi - 1]
            HW = blk['H'] * blk['W']
            S = blk['OH'] * blk['OW']
            KT = blk['kh'] * blk['kw']
            g = g_ref[...]                                       # [HW, KT*S] bf16
            wf = wf_ref[...]                                     # [Cout, KT*Cin] bf16
            outs = []
            for b in range(B):
                a_b = a[:, b * HW:(b + 1) * HW].astype(jnp.bfloat16)   # [Cin, HW]
                p_wide = jnp.dot(a_b, g,                                # [Cin, KT*S]
                                 preferred_element_type=jnp.float32)
                # relayout to im2col rows (tap-major) -> one conv matmul
                p_stack = jnp.concatenate(                              # [KT*Cin, S]
                    [p_wide[:, t * S:(t + 1) * S] for t in range(KT)], axis=0)
                outs.append(jnp.dot(wf, p_stack.astype(jnp.bfloat16),   # [Cout, S]
                                    preferred_element_type=jnp.float32))
            a = outs[0] if B == 1 else jnp.concatenate(outs, axis=1)    # [Cout, B*S]
            a = epilogue(a, bi, blk)

        # ---- flatten (OH=OW=1 -> a is [C, B]) + linear, kept transposed -----
        # out=5 / B=2 are both lane-masked anyway; keep the proven [out, B]
        # store and let the wrapper do the single tiny transpose.
        o_ref[...] = (jnp.dot(wlin_ref[...], a.astype(jnp.bfloat16),
                              preferred_element_type=jnp.float32)
                      + blin_ref[...])

    return kernel


# ---------------------------------------------------------------------------
# Wrapper: builds gather constants, packs params, calls the fused kernel
# ---------------------------------------------------------------------------
def make_forward(config, x_shape):
    blocks, linear, n_params = parse_config(config)
    B, cin, H, W = x_shape
    for blk in blocks:
        assert blk['cin'] == cin
        OH = (H + 2 * blk['pad'] - blk['kh']) // blk['stride'] + 1
        OW = (W + 2 * blk['pad'] - blk['kw']) // blk['stride'] + 1
        blk.update(H=H, W=W, OH=OH, OW=OW)
        H, W, cin = OH, OW, blk['cout']
    # TODO(synk): flatten with trailing spatial extent > 1 would need a
    # (c,oh,ow)-ordered relayout before the linear layer.
    assert H == 1 and W == 1 and linear['inp'] == cin

    # Batch-independent {0,1} gather constants (exact in bf16).
    # TODO(synk): on v7x these could be stored as fp8 to halve their footprint;
    # kept bf16 for v5e/v6e portability.
    gathers = [jnp.asarray(
        make_gather_wide(blk['H'], blk['W'], blk['kh'], blk['kw'],
                         blk['stride'], blk['pad'], blk['OH'], blk['OW']),
        dtype=jnp.bfloat16) for blk in blocks[1:]]

    max_c = max(blk['cout'] for blk in blocks)
    blk0 = blocks[0]
    kernel = build_kernel(blocks, B)
    n_inputs = 2 + 2 * len(gathers) + 3

    # Advisory cost estimate + VMEM limit sized to the actual (tiny) buffers.
    flops = 2 * blk0['cout'] * blk0['cin'] * blk0['kh'] * blk0['kw'] * B * blk0['OH'] * blk0['OW']
    in_bytes = 2 * (blk0['cin'] * blk0['kh'] * blk0['kw'] * B * blk0['OH'] * blk0['OW']
                    + blk0['cout'] * blk0['cin'] * blk0['kh'] * blk0['kw'])
    for blk, g in zip(blocks[1:], gathers):
        KT = blk['kh'] * blk['kw']
        S = blk['OH'] * blk['OW']
        flops += 2 * B * blk['cin'] * blk['H'] * blk['W'] * KT * S     # gather matmul
        flops += 2 * B * blk['cout'] * KT * blk['cin'] * S             # conv matmul
        in_bytes += 2 * (g.size + blk['cout'] * KT * blk['cin'])
    flops += 2 * linear['out'] * linear['inp'] * B
    in_bytes += (len(blocks) * max_c * 3 * 4
                 + linear['out'] * linear['inp'] * 2 + linear['out'] * 4)
    out_bytes = linear['out'] * B * 4
    vmem_limit = int(min(48 * 1024 * 1024,
                         max(16 * 1024 * 1024, 8 * (in_bytes + out_bytes))))

    # TODO(synk): a parallel grid over samples / MAML tasks (to use both v7x
    # TensorCores) needs a cross-core reduction of the batch-norm statistics;
    # kept grid-less here so BN sees the whole batch.
    call = pl.pallas_call(
        kernel,
        out_shape=jax.ShapeDtypeStruct((linear['out'], B), jnp.float32),
        in_specs=[pl.BlockSpec(memory_space=pltpu.MemorySpace.VMEM)] * n_inputs,
        out_specs=pl.BlockSpec(memory_space=pltpu.MemorySpace.VMEM),
        compiler_params=pltpu.CompilerParams(vmem_limit_bytes=vmem_limit),
        cost_estimate=pl.CostEstimate(flops=int(flops),
                                      transcendentals=int(len(blocks) * max_c),
                                      bytes_accessed=int(in_bytes + out_bytes)),
    )

    def im2col_first(x):
        s, p = blk0['stride'], blk0['pad']
        KH, KW, OH, OW = blk0['kh'], blk0['kw'], blk0['OH'], blk0['OW']
        if p > 0:
            x = jnp.pad(x, ((0, 0), (0, 0), (p, p), (p, p)))
        cols = [x[:, :, kh: kh + s * (OH - 1) + 1: s, kw: kw + s * (OW - 1) + 1: s]
                for kh in range(KH) for kw in range(KW)]
        pt = jnp.stack(cols, axis=2)                    # [B, Cin, KT, OH, OW]
        pt = pt.transpose(1, 2, 0, 3, 4).reshape(blk0['cin'] * KH * KW, B * OH * OW)
        return pt.astype(jnp.bfloat16)

    def forward(x, params):
        assert len(params) == n_params
        # TODO(synk): bn_training=False (running-stats) path and the running
        # mean/var updates of the PyTorch module are not reproduced here.
        w1 = params[blk0['w_idx']]
        inputs = [im2col_first(x),
                  w1.reshape(blk0['cout'], -1).astype(jnp.bfloat16)]
        for blk, g in zip(blocks[1:], gathers):
            w = params[blk['w_idx']]
            # [Cout, Cin, KH, KW] -> [Cout, KT*Cin], rows matching p_stack order.
            wflat = w.transpose(0, 2, 3, 1).reshape(
                blk['cout'], blk['kh'] * blk['kw'] * blk['cin'])
            inputs += [g, wflat.astype(jnp.bfloat16)]
        cps = []
        for blk in blocks:
            cout = blk['cout']
            bias = params[blk['w_idx'] + 1]
            if blk['bn']:
                gamma, beta = params[blk['bn_idx']], params[blk['bn_idx'] + 1]
            else:
                gamma = jnp.ones((cout,), jnp.float32)
                beta = jnp.zeros((cout,), jnp.float32)
            cp = jnp.stack([bias, gamma, beta], axis=-1)          # [cout, 3]
            if cout < max_c:
                cp = jnp.pad(cp, ((0, max_c - cout), (0, 0)))
            cps.append(cp)
        inputs += [jnp.stack(cps, axis=0),                        # [n_blocks, max_c, 3]
                   params[linear['w_idx']].astype(jnp.bfloat16),
                   params[linear['w_idx'] + 1].reshape(linear['out'], 1)]
        return call(*inputs).T                                    # [out, B] -> [B, out]

    return jax.jit(forward)


# ---------------------------------------------------------------------------
# Parameter init (deterministic, mirrors Learner.__init__ shapes)
# ---------------------------------------------------------------------------
def kaiming_normal(key, shape, fan_in):
    return math.sqrt(2.0 / fan_in) * jax.random.normal(key, shape, dtype=jnp.float32)


def init_params(config, key):
    params = []
    for name, param in config:
        if name == 'conv2d':
            cout, cin, kh, kw = param[:4]
            key, sub = jax.random.split(key)
            params.append(kaiming_normal(sub, (cout, cin, kh, kw), cin * kh * kw))
            params.append(jnp.zeros((cout,), jnp.float32))
        elif name == 'linear':
            out_f, in_f = param
            key, sub = jax.random.split(key)
            params.append(kaiming_normal(sub, (out_f, in_f), in_f))
            params.append(jnp.zeros((out_f,), jnp.float32))
        elif name == 'bn':
            params.append(jnp.ones((param[0],), jnp.float32))    # weight
            params.append(jnp.zeros((param[0],), jnp.float32))   # bias
        elif name in ('relu', 'flatten', 'tanh', 'sigmoid', 'leakyrelu',
                      'upsample', 'max_pool2d', 'avg_pool2d', 'reshape'):
            continue
        else:
            raise NotImplementedError(name)
    return params


# ---------------------------------------------------------------------------
# Pure-JAX reference (numerical sanity check)
# ---------------------------------------------------------------------------
def reference_forward(x, params, config, compute_dtype=jnp.float32):
    """Reference forward.  With compute_dtype=bfloat16 it applies the same
    bf16-operand / f32-accumulate contract as the kernel's MXU path (bias, relu
    and batch-norm stay f32), so kernel-vs-reference differences isolate
    kernel-structure bugs rather than the intended mixed-precision rounding."""
    cd = compute_dtype
    idx = 0
    for name, param in config:
        if name == 'conv2d':
            s, p = param[4], param[5]
            w, b = params[idx], params[idx + 1]
            idx += 2
            x = jax.lax.conv_general_dilated(
                x.astype(cd), w.astype(cd), (s, s), [(p, p), (p, p)],
                dimension_numbers=('NCHW', 'OIHW', 'NCHW'),
                preferred_element_type=jnp.float32,
            ) + b.reshape(1, -1, 1, 1)
        elif name == 'relu':
            x = jnp.maximum(x, 0.0)
        elif name == 'bn':
            g, bt = params[idx], params[idx + 1]
            idx += 2
            mean = jnp.mean(x, axis=(0, 2, 3), keepdims=True)
            var = jnp.mean(jnp.square(x - mean), axis=(0, 2, 3), keepdims=True)
            x = (x - mean) * jax.lax.rsqrt(var + BN_EPS)
            x = x * g.reshape(1, -1, 1, 1) + bt.reshape(1, -1, 1, 1)
        elif name == 'flatten':
            x = x.reshape(x.shape[0], -1)
        elif name == 'linear':
            w, b = params[idx], params[idx + 1]
            idx += 2
            x = jnp.dot(x.astype(cd), w.astype(cd).T,
                        preferred_element_type=jnp.float32) + b
        else:
            raise NotImplementedError(name)
    return x


if __name__ == "__main__":
    key = jax.random.PRNGKey(0)
    key, xkey, pkey = jax.random.split(key, 3)

    # x: [b, 1, 28, 28] as documented in Learner.forward
    x = jax.random.normal(xkey, (2, 1, 28, 28), dtype=jnp.float32)
    params = init_params(CONFIG, pkey)

    forward = make_forward(CONFIG, x.shape)
    out = jax.block_until_ready(forward(x, params))
    assert out.shape == (2, 5), out.shape

    # Matched-precision reference (bf16 matmul operands, f32 accumulation / BN):
    # comparing against a pure-f32 reference would mostly measure the intended
    # bf16 MXU rounding, which the tiny per-channel batches of the later
    # batch-norms can amplify; this comparison checks the kernel structure.
    ref = jax.block_until_ready(
        reference_forward(x, params, CONFIG, compute_dtype=jnp.bfloat16))
    np.testing.assert_allclose(np.asarray(out), np.asarray(ref), rtol=2e-2, atol=2e-2)

    print("KERNEL_OK")
</pallas_src>

<mosaic_0001>
module attributes {stable_mosaic.version = 11 : i64} {
  func.func @kernel(%arg0: memref<9x338xbf16, #tpu.memory_space<vmem>>, %arg1: memref<8x9xbf16, #tpu.memory_space<vmem>>, %arg2: memref<169x324xbf16, #tpu.memory_space<vmem>>, %arg3: memref<8x72xbf16, #tpu.memory_space<vmem>>, %arg4: memref<36x36xbf16, #tpu.memory_space<vmem>>, %arg5: memref<8x72xbf16, #tpu.memory_space<vmem>>, %arg6: memref<4x4xbf16, #tpu.memory_space<vmem>>, %arg7: memref<8x32xbf16, #tpu.memory_space<vmem>>, %arg8: memref<4x8x3xf32, #tpu.memory_space<vmem>>, %arg9: memref<5x8xbf16, #tpu.memory_space<vmem>>, %arg10: memref<5x1xf32, #tpu.memory_space<vmem>>, %arg11: memref<5x2xf32, #tpu.memory_space<vmem>>) attributes {dimension_semantics = [], scalar_prefetch = 0 : i64, scratch_operands = 0 : i64, tpu.core_type = #tpu.core_type<tc>} {
    %c0 = arith.constant 0 : index
    %c0_0 = arith.constant 0 : index
    %0 = vector.load %arg1[%c0, %c0_0] : memref<8x9xbf16, #tpu.memory_space<vmem>>, vector<8x9xbf16>
    %c0_1 = arith.constant 0 : index
    %c0_2 = arith.constant 0 : index
    %1 = vector.load %arg0[%c0_1, %c0_2] : memref<9x338xbf16, #tpu.memory_space<vmem>>, vector<9x338xbf16>
    %cst = arith.constant dense<0.000000e+00> : vector<8x338xf32>
    %2 = tpu.matmul %0, %1, %cst {dimension_numbers = #tpu.dot_dimension_numbers<[1], [0], [0], [1], [0, 0, 1, 1], [], []>} : vector<8x9xbf16>, vector<9x338xbf16>, vector<8x338xf32> -> vector<8x338xf32>
    %c0_3 = arith.constant 0 : index
    %c0_4 = arith.constant 0 : index
    %c0_5 = arith.constant 0 : index
    %3 = vector.load %arg8[%c0_3, %c0_4, %c0_5] : memref<4x8x3xf32, #tpu.memory_space<vmem>>, vector<1x8x3xf32>
    %4 = vector.shape_cast %3 : vector<1x8x3xf32> to vector<8x3xf32>
    %5 = vector.extract_strided_slice %4 {offsets = [0, 0], sizes = [8, 1], strides = [1, 1]} : vector<8x3xf32> to vector<8x1xf32>
    %6 = vector.broadcast %5 : vector<8x1xf32> to vector<8x338xf32>
    %7 = arith.addf %2, %6 : vector<8x338xf32>
    %cst_6 = arith.constant 0.000000e+00 : f32
    %8 = vector.broadcast %cst_6 : f32 to vector<8x338xf32>
    %9 = arith.maximumf %7, %8 : vector<8x338xf32>
    %cst_7 = arith.constant dense<0.000000e+00> : vector<8xf32>
    %10 = vector.multi_reduction <add>, %9, %cst_7 [1] : vector<8x338xf32> to vector<8xf32>
    %11 = vector.shape_cast %10 : vector<8xf32> to vector<8x1xf32>
    %cst_8 = arith.constant 2.958580e-03 : f32
    %12 = vector.broadcast %cst_8 : f32 to vector<8x1xf32>
    %13 = arith.mulf %11, %12 : vector<8x1xf32>
    %14 = vector.broadcast %13 : vector<8x1xf32> to vector<8x338xf32>
    %15 = arith.subf %9, %14 : vector<8x338xf32>
    %16 = arith.mulf %15, %15 : vector<8x338xf32>
    %cst_9 = arith.constant dense<0.000000e+00> : vector<8xf32>
    %17 = vector.multi_reduction <add>, %16, %cst_9 [1] : vector<8x338xf32> to vector<8xf32>
    %18 = vector.shape_cast %17 : vector<8xf32> to vector<8x1xf32>
    %cst_10 = arith.constant 2.958580e-03 : f32
    %19 = vector.broadcast %cst_10 : f32 to vector<8x1xf32>
    %20 = arith.mulf %18, %19 : vector<8x1xf32>
    %cst_11 = arith.constant 9.99999974E-6 : f32
    %21 = vector.broadcast %cst_11 : f32 to vector<8x1xf32>
    %22 = arith.addf %20, %21 : vector<8x1xf32>
    %23 = math.rsqrt %22 : vector<8x1xf32>
    %24 = vector.broadcast %23 : vector<8x1xf32> to vector<8x338xf32>
    %25 = arith.mulf %15, %24 : vector<8x338xf32>
    %26 = vector.extract_strided_slice %4 {offsets = [0, 1], sizes = [8, 1], strides = [1, 1]} : vector<8x3xf32> to vector<8x1xf32>
    %27 = vector.broadcast %26 : vector<8x1xf32> to vector<8x338xf32>
    %28 = arith.mulf %25, %27 : vector<8x338xf32>
    %29 = vector.extract_strided_slice %4 {offsets = [0, 2], sizes = [8, 1], strides = [1, 1]} : vector<8x3xf32> to vector<8x1xf32>
    %30 = vector.broadcast %29 : vector<8x1xf32> to vector<8x338xf32>
    %31 = arith.addf %28, %30 : vector<8x338xf32>
    %c0_12 = arith.constant 0 : index
    %c0_13 = arith.constant 0 : index
    %32 = vector.load %arg2[%c0_12, %c0_13] : memref<169x324xbf16, #tpu.memory_space<vmem>>, vector<169x324xbf16>
    %c0_14 = arith.constant 0 : index
    %c0_15 = arith.constant 0 : index
    %33 = vector.load %arg3[%c0_14, %c0_15] : memref<8x72xbf16, #tpu.memory_space<vmem>>, vector<8x72xbf16>
    %34 = vector.extract_strided_slice %31 {offsets = [0, 0], sizes = [8, 169], strides = [1, 1]} : vector<8x338xf32> to vector<8x169xf32>
    %35 = arith.truncf %34 : vector<8x169xf32> to vector<8x169xbf16>
    %cst_16 = arith.constant dense<0.000000e+00> : vector<8x324xf32>
    %36 = tpu.matmul %35, %32, %cst_16 {dimension_numbers = #tpu.dot_dimension_numbers<[1], [0], [0], [1], [0, 0, 1, 1], [], []>} : vector<8x169xbf16>, vector<169x324xbf16>, vector<8x324xf32> -> vector<8x324xf32>
    %37 = vector.extract_strided_slice %36 {offsets = [0, 0], sizes = [8, 36], strides = [1, 1]} : vector<8x324xf32> to vector<8x36xf32>
    %38 = vector.extract_strided_slice %36 {offsets = [0, 36], sizes = [8, 36], strides = [1, 1]} : vector<8x324xf32> to vector<8x36xf32>
    %39 = vector.extract_strided_slice %36 {offsets = [0, 72], sizes = [8, 36], strides = [1, 1]} : vector<8x324xf32> to vector<8x36xf32>
    %40 = vector.extract_strided_slice %36 {offsets = [0, 108], sizes = [8, 36], strides = [1, 1]} : vector<8x324xf32> to vector<8x36xf32>
    %41 = vector.extract_strided_slice %36 {offsets = [0, 144], sizes = [8, 36], strides = [1, 1]} : vector<8x324xf32> to vector<8x36xf32>
    %42 = vector.extract_strided_slice %36 {offsets = [0, 180], sizes = [8, 36], strides = [1, 1]} : vector<8x324xf32> to vector<8x36xf32>
    %43 = vector.extract_strided_slice %36 {offsets = [0, 216], sizes = [8, 36], strides = [1, 1]} : vector<8x324xf32> to vector<8x36xf32>
    %44 = vector.extract_strided_slice %36 {offsets = [0, 252], sizes = [8, 36], strides = [1, 1]} : vector<8x324xf32> to vector<8x36xf32>
    %45 = vector.extract_strided_slice %36 {offsets = [0, 288], sizes = [8, 36], strides = [1, 1]} : vector<8x324xf32> to vector<8x36xf32>
    %46 = tpu.concatenate %37, %38, %39, %40, %41, %42, %43, %44, %45 in 0 : vector<8x36xf32>, vector<8x36xf32>, vector<8x36xf32>, vector<8x36xf32>, vector<8x36xf32>, vector<8x36xf32>, vector<8x36xf32>, vector<8x36xf32>, vector<8x36xf32> -> vector<72x36xf32>
    %47 = arith.truncf %46 : vector<72x36xf32> to vector<72x36xbf16>
    %cst_17 = arith.constant dense<0.000000e+00> : vector<8x36xf32>
    %48 = tpu.matmul %33, %47, %cst_17 {dimension_numbers = #tpu.dot_dimension_numbers<[1], [0], [0], [1], [0, 0, 1, 1], [], []>} : vector<8x72xbf16>, vector<72x36xbf16>, vector<8x36xf32> -> vector<8x36xf32>
    %49 = vector.extract_strided_slice %31 {offsets = [0, 169], sizes = [8, 169], strides = [1, 1]} : vector<8x338xf32> to vector<8x169xf32>
    %50 = arith.truncf %49 : vector<8x169xf32> to vector<8x169xbf16>
    %cst_18 = arith.constant dense<0.000000e+00> : vector<8x324xf32>
    %51 = tpu.matmul %50, %32, %cst_18 {dimension_numbers = #tpu.dot_dimension_numbers<[1], [0], [0], [1], [0, 0, 1, 1], [], []>} : vector<8x169xbf16>, vector<169x324xbf16>, vector<8x324xf32> -> vector<8x324xf32>
    %52 = vector.extract_strided_slice %51 {offsets = [0, 0], sizes = [8, 36], strides = [1, 1]} : vector<8x324xf32> to vector<8x36xf32>
    %53 = vector.extract_strided_slice %51 {offsets = [0, 36], sizes = [8, 36], strides = [1, 1]} : vector<8x324xf32> to vector<8x36xf32>
    %54 = vector.extract_strided_slice %51 {offsets = [0, 72], sizes = [8, 36], strides = [1, 1]} : vector<8x324xf32> to vector<8x36xf32>
    %55 = vector.extract_strided_slice %51 {offsets = [0, 108], sizes = [8, 36], strides = [1, 1]} : vector<8x324xf32> to vector<8x36xf32>
    %56 = vector.extract_strided_slice %51 {offsets = [0, 144], sizes = [8, 36], strides = [1, 1]} : vector<8x324xf32> to vector<8x36xf32>
    %57 = vector.extract_strided_slice %51 {offsets = [0, 180], sizes = [8, 36], strides = [1, 1]} : vector<8x324xf32> to vector<8x36xf32>
    %58 = vector.extract_strided_slice %51 {offsets = [0, 216], sizes = [8, 36], strides = [1, 1]} : vector<8x324xf32> to vector<8x36xf32>
    %59 = vector.extract_strided_slice %51 {offsets = [0, 252], sizes = [8, 36], strides = [1, 1]} : vector<8x324xf32> to vector<8x36xf32>
    %60 = vector.extract_strided_slice %51 {offsets = [0, 288], sizes = [8, 36], strides = [1, 1]} : vector<8x324xf32> to vector<8x36xf32>
    %61 = tpu.concatenate %52, %53, %54, %55, %56, %57, %58, %59, %60 in 0 : vector<8x36xf32>, vector<8x36xf32>, vector<8x36xf32>, vector<8x36xf32>, vector<8x36xf32>, vector<8x36xf32>, vector<8x36xf32>, vector<8x36xf32>, vector<8x36xf32> -> vector<72x36xf32>
    %62 = arith.truncf %61 : vector<72x36xf32> to vector<72x36xbf16>
    %cst_19 = arith.constant dense<0.000000e+00> : vector<8x36xf32>
    %63 = tpu.matmul %33, %62, %cst_19 {dimension_numbers = #tpu.dot_dimension_numbers<[1], [0], [0], [1], [0, 0, 1, 1], [], []>} : vector<8x72xbf16>, vector<72x36xbf16>, vector<8x36xf32> -> vector<8x36xf32>
    %64 = tpu.concatenate %48, %63 in 1 : vector<8x36xf32>, vector<8x36xf32> -> vector<8x72xf32>
    %c1 = arith.constant 1 : index
    %c0_20 = arith.constant 0 : index
    %c0_21 = arith.constant 0 : index
    %65 = vector.load %arg8[%c1, %c0_20, %c0_21] : memref<4x8x3xf32, #tpu.memory_space<vmem>>, vector<1x8x3xf32>
    %66 = vector.shape_cast %65 : vector<1x8x3xf32> to vector<8x3xf32>
    %67 = vector.extract_strided_slice %66 {offsets = [0, 0], sizes = [8, 1], strides = [1, 1]} : vector<8x3xf32> to vector<8x1xf32>
    %68 = vector.broadcast %67 : vector<8x1xf32> to vector<8x72xf32>
    %69 = arith.addf %64, %68 : vector<8x72xf32>
    %cst_22 = arith.constant 0.000000e+00 : f32
    %70 = vector.broadcast %cst_22 : f32 to vector<8x72xf32>
    %71 = arith.maximumf %69, %70 : vector<8x72xf32>
    %cst_23 = arith.constant dense<0.000000e+00> : vector<8xf32>
    %72 = vector.multi_reduction <add>, %71, %cst_23 [1] : vector<8x72xf32> to vector<8xf32>
    %73 = vector.shape_cast %72 : vector<8xf32> to vector<8x1xf32>
    %cst_24 = arith.constant 0.013888889 : f32
    %74 = vector.broadcast %cst_24 : f32 to vector<8x1xf32>
    %75 = arith.mulf %73, %74 : vector<8x1xf32>
    %76 = vector.broadcast %75 : vector<8x1xf32> to vector<8x72xf32>
    %77 = arith.subf %71, %76 : vector<8x72xf32>
    %78 = arith.mulf %77, %77 : vector<8x72xf32>
    %cst_25 = arith.constant dense<0.000000e+00> : vector<8xf32>
    %79 = vector.multi_reduction <add>, %78, %cst_25 [1] : vector<8x72xf32> to vector<8xf32>
    %80 = vector.shape_cast %79 : vector<8xf32> to vector<8x1xf32>
    %cst_26 = arith.constant 0.013888889 : f32
    %81 = vector.broadcast %cst_26 : f32 to vector<8x1xf32>
    %82 = arith.mulf %80, %81 : vector<8x1xf32>
    %cst_27 = arith.constant 9.99999974E-6 : f32
    %83 = vector.broadcast %cst_27 : f32 to vector<8x1xf32>
    %84 = arith.addf %82, %83 : vector<8x1xf32>
    %85 = math.rsqrt %84 : vector<8x1xf32>
    %86 = vector.broadcast %85 : vector<8x1xf32> to vector<8x72xf32>
    %87 = arith.mulf %77, %86 : vector<8x72xf32>
    %88 = vector.extract_strided_slice %66 {offsets = [0, 1], sizes = [8, 1], strides = [1, 1]} : vector<8x3xf32> to vector<8x1xf32>
    %89 = vector.broadcast %88 : vector<8x1xf32> to vector<8x72xf32>
    %90 = arith.mulf %87, %89 : vector<8x72xf32>
    %91 = vector.extract_strided_slice %66 {offsets = [0, 2], sizes = [8, 1], strides = [1, 1]} : vector<8x3xf32> to vector<8x1xf32>
    %92 = vector.broadcast %91 : vector<8x1xf32> to vector<8x72xf32>
    %93 = arith.addf %90, %92 : vector<8x72xf32>
    %c0_28 = arith.constant 0 : index
    %c0_29 = arith.constant 0 : index
    %94 = vector.load %arg4[%c0_28, %c0_29] : memref<36x36xbf16, #tpu.memory_space<vmem>>, vector<36x36xbf16>
    %c0_30 = arith.constant 0 : index
    %c0_31 = arith.constant 0 : index
    %95 = vector.load %arg5[%c0_30, %c0_31] : memref<8x72xbf16, #tpu.memory_space<vmem>>, vector<8x72xbf16>
    %96 = vector.extract_strided_slice %93 {offsets = [0, 0], sizes = [8, 36], strides = [1, 1]} : vector<8x72xf32> to vector<8x36xf32>
    %97 = arith.truncf %96 : vector<8x36xf32> to vector<8x36xbf16>
    %cst_32 = arith.constant dense<0.000000e+00> : vector<8x36xf32>
    %98 = tpu.matmul %97, %94, %cst_32 {dimension_numbers = #tpu.dot_dimension_numbers<[1], [0], [0], [1], [0, 0, 1, 1], [], []>} : vector<8x36xbf16>, vector<36x36xbf16>, vector<8x36xf32> -> vector<8x36xf32>
    %99 = vector.extract_strided_slice %98 {offsets = [0, 0], sizes = [8, 4], strides = [1, 1]} : vector<8x36xf32> to vector<8x4xf32>
    %100 = vector.extract_strided_slice %98 {offsets = [0, 4], sizes = [8, 4], strides = [1, 1]} : vector<8x36xf32> to vector<8x4xf32>
    %101 = vector.extract_strided_slice %98 {offsets = [0, 8], sizes = [8, 4], strides = [1, 1]} : vector<8x36xf32> to vector<8x4xf32>
    %102 = vector.extract_strided_slice %98 {offsets = [0, 12], sizes = [8, 4], strides = [1, 1]} : vector<8x36xf32> to vector<8x4xf32>
    %103 = vector.extract_strided_slice %98 {offsets = [0, 16], sizes = [8, 4], strides = [1, 1]} : vector<8x36xf32> to vector<8x4xf32>
    %104 = vector.extract_strided_slice %98 {offsets = [0, 20], sizes = [8, 4], strides = [1, 1]} : vector<8x36xf32> to vector<8x4xf32>
    %105 = vector.extract_strided_slice %98 {offsets = [0, 24], sizes = [8, 4], strides = [1, 1]} : vector<8x36xf32> to vector<8x4xf32>
    %106 = vector.extract_strided_slice %98 {offsets = [0, 28], sizes = [8, 4], strides = [1, 1]} : vector<8x36xf32> to vector<8x4xf32>
    %107 = vector.extract_strided_slice %98 {offsets = [0, 32], sizes = [8, 4], strides = [1, 1]} : vector<8x36xf32> to vector<8x4xf32>
    %108 = tpu.concatenate %99, %100, %101, %102, %103, %104, %105, %106, %107 in 0 : vector<8x4xf32>, vector<8x4xf32>, vector<8x4xf32>, vector<8x4xf32>, vector<8x4xf32>, vector<8x4xf32>, vector<8x4xf32>, vector<8x4xf32>, vector<8x4xf32> -> vector<72x4xf32>
    %109 = arith.truncf %108 : vector<72x4xf32> to vector<72x4xbf16>
    %cst_33 = arith.constant dense<0.000000e+00> : vector<8x4xf32>
    %110 = tpu.matmul %95, %109, %cst_33 {dimension_numbers = #tpu.dot_dimension_numbers<[1], [0], [0], [1], [0, 0, 1, 1], [], []>} : vector<8x72xbf16>, vector<72x4xbf16>, vector<8x4xf32> -> vector<8x4xf32>
    %111 = vector.extract_strided_slice %93 {offsets = [0, 36], sizes = [8, 36], strides = [1, 1]} : vector<8x72xf32> to vector<8x36xf32>
    %112 = arith.truncf %111 : vector<8x36xf32> to vector<8x36xbf16>
    %cst_34 = arith.constant dense<0.000000e+00> : vector<8x36xf32>
    %113 = tpu.matmul %112, %94, %cst_34 {dimension_numbers = #tpu.dot_dimension_numbers<[1], [0], [0], [1], [0, 0, 1, 1], [], []>} : vector<8x36xbf16>, vector<36x36xbf16>, vector<8x36xf32> -> vector<8x36xf32>
    %114 = vector.extract_strided_slice %113 {offsets = [0, 0], sizes = [8, 4], strides = [1, 1]} : vector<8x36xf32> to vector<8x4xf32>
    %115 = vector.extract_strided_slice %113 {offsets = [0, 4], sizes = [8, 4], strides = [1, 1]} : vector<8x36xf32> to vector<8x4xf32>
    %116 = vector.extract_strided_slice %113 {offsets = [0, 8], sizes = [8, 4], strides = [1, 1]} : vector<8x36xf32> to vector<8x4xf32>
    %117 = vector.extract_strided_slice %113 {offsets = [0, 12], sizes = [8, 4], strides = [1, 1]} : vector<8x36xf32> to vector<8x4xf32>
    %118 = vector.extract_strided_slice %113 {offsets = [0, 16], sizes = [8, 4], strides = [1, 1]} : vector<8x36xf32> to vector<8x4xf32>
    %119 = vector.extract_strided_slice %113 {offsets = [0, 20], sizes = [8, 4], strides = [1, 1]} : vector<8x36xf32> to vector<8x4xf32>
    %120 = vector.extract_strided_slice %113 {offsets = [0, 24], sizes = [8, 4], strides = [1, 1]} : vector<8x36xf32> to vector<8x4xf32>
    %121 = vector.extract_strided_slice %113 {offsets = [0, 28], sizes = [8, 4], strides = [1, 1]} : vector<8x36xf32> to vector<8x4xf32>
    %122 = vector.extract_strided_slice %113 {offsets = [0, 32], sizes = [8, 4], strides = [1, 1]} : vector<8x36xf32> to vector<8x4xf32>
    %123 = tpu.concatenate %114, %115, %116, %117, %118, %119, %120, %121, %122 in 0 : vector<8x4xf32>, vector<8x4xf32>, vector<8x4xf32>, vector<8x4xf32>, vector<8x4xf32>, vector<8x4xf32>, vector<8x4xf32>, vector<8x4xf32>, vector<8x4xf32> -> vector<72x4xf32>
    %124 = arith.truncf %123 : vector<72x4xf32> to vector<72x4xbf16>
    %cst_35 = arith.constant dense<0.000000e+00> : vector<8x4xf32>
    %125 = tpu.matmul %95, %124, %cst_35 {dimension_numbers = #tpu.dot_dimension_numbers<[1], [0], [0], [1], [0, 0, 1, 1], [], []>} : vector<8x72xbf16>, vector<72x4xbf16>, vector<8x4xf32> -> vector<8x4xf32>
    %126 = tpu.concatenate %110, %125 in 1 : vector<8x4xf32>, vector<8x4xf32> -> vector<8x8xf32>
    %c2 = arith.constant 2 : index
    %c0_36 = arith.constant 0 : index
    %c0_37 = arith.constant 0 : index
    %127 = vector.load %arg8[%c2, %c0_36, %c0_37] : memref<4x8x3xf32, #tpu.memory_space<vmem>>, vector<1x8x3xf32>
    %128 = vector.shape_cast %127 : vector<1x8x3xf32> to vector<8x3xf32>
    %129 = vector.extract_strided_slice %128 {offsets = [0, 0], sizes = [8, 1], strides = [1, 1]} : vector<8x3xf32> to vector<8x1xf32>
    %130 = vector.broadcast %129 : vector<8x1xf32> to vector<8x8xf32>
    %131 = arith.addf %126, %130 : vector<8x8xf32>
    %cst_38 = arith.constant 0.000000e+00 : f32
    %132 = vector.broadcast %cst_38 : f32 to vector<8x8xf32>
    %133 = arith.maximumf %131, %132 : vector<8x8xf32>
    %cst_39 = arith.constant dense<0.000000e+00> : vector<8xf32>
    %134 = vector.multi_reduction <add>, %133, %cst_39 [1] : vector<8x8xf32> to vector<8xf32>
    %135 = vector.shape_cast %134 : vector<8xf32> to vector<8x1xf32>
    %cst_40 = arith.constant 1.250000e-01 : f32
    %136 = vector.broadcast %cst_40 : f32 to vector<8x1xf32>
    %137 = arith.mulf %135, %136 : vector<8x1xf32>
    %138 = vector.broadcast %137 : vector<8x1xf32> to vector<8x8xf32>
    %139 = arith.subf %133, %138 : vector<8x8xf32>
    %140 = arith.mulf %139, %139 : vector<8x8xf32>
    %cst_41 = arith.constant dense<0.000000e+00> : vector<8xf32>
    %141 = vector.multi_reduction <add>, %140, %cst_41 [1] : vector<8x8xf32> to vector<8xf32>
    %142 = vector.shape_cast %141 : vector<8xf32> to vector<8x1xf32>
    %cst_42 = arith.constant 1.250000e-01 : f32
    %143 = vector.broadcast %cst_42 : f32 to vector<8x1xf32>
    %144 = arith.mulf %142, %143 : vector<8x1xf32>
    %cst_43 = arith.constant 9.99999974E-6 : f32
    %145 = vector.broadcast %cst_43 : f32 to vector<8x1xf32>
    %146 = arith.addf %144, %145 : vector<8x1xf32>
    %147 = math.rsqrt %146 : vector<8x1xf32>
    %148 = vector.broadcast %147 : vector<8x1xf32> to vector<8x8xf32>
    %149 = arith.mulf %139, %148 : vector<8x8xf32>
    %150 = vector.extract_strided_slice %128 {offsets = [0, 1], sizes = [8, 1], strides = [1, 1]} : vector<8x3xf32> to vector<8x1xf32>
    %151 = vector.broadcast %150 : vector<8x1xf32> to vector<8x8xf32>
    %152 = arith.mulf %149, %151 : vector<8x8xf32>
    %153 = vector.extract_strided_slice %128 {offsets = [0, 2], sizes = [8, 1], strides = [1, 1]} : vector<8x3xf32> to vector<8x1xf32>
    %154 = vector.broadcast %153 : vector<8x1xf32> to vector<8x8xf32>
    %155 = arith.addf %152, %154 : vector<8x8xf32>
    %c0_44 = arith.constant 0 : index
    %c0_45 = arith.constant 0 : index
    %156 = vector.load %arg6[%c0_44, %c0_45] : memref<4x4xbf16, #tpu.memory_space<vmem>>, vector<4x4xbf16>
    %c0_46 = arith.constant 0 : index
    %c0_47 = arith.constant 0 : index
    %157 = vector.load %arg7[%c0_46, %c0_47] : memref<8x32xbf16, #tpu.memory_space<vmem>>, vector<8x32xbf16>
    %158 = vector.extract_strided_slice %155 {offsets = [0, 0], sizes = [8, 4], strides = [1, 1]} : vector<8x8xf32> to vector<8x4xf32>
    %159 = arith.truncf %158 : vector<8x4xf32> to vector<8x4xbf16>
    %cst_48 = arith.constant dense<0.000000e+00> : vector<8x4xf32>
    %160 = tpu.matmul %159, %156, %cst_48 {dimension_numbers = #tpu.dot_dimension_numbers<[1], [0], [0], [1], [0, 0, 1, 1], [], []>} : vector<8x4xbf16>, vector<4x4xbf16>, vector<8x4xf32> -> vector<8x4xf32>
    %161 = vector.extract_strided_slice %160 {offsets = [0, 0], sizes = [8, 1], strides = [1, 1]} : vector<8x4xf32> to vector<8x1xf32>
    %162 = vector.extract_strided_slice %160 {offsets = [0, 1], sizes = [8, 1], strides = [1, 1]} : vector<8x4xf32> to vector<8x1xf32>
    %163 = vector.extract_strided_slice %160 {offsets = [0, 2], sizes = [8, 1], strides = [1, 1]} : vector<8x4xf32> to vector<8x1xf32>
    %164 = vector.extract_strided_slice %160 {offsets = [0, 3], sizes = [8, 1], strides = [1, 1]} : vector<8x4xf32> to vector<8x1xf32>
    %165 = tpu.concatenate %161, %162, %163, %164 in 0 : vector<8x1xf32>, vector<8x1xf32>, vector<8x1xf32>, vector<8x1xf32> -> vector<32x1xf32>
    %166 = arith.truncf %165 : vector<32x1xf32> to vector<32x1xbf16>
    %cst_49 = arith.constant dense<0.000000e+00> : vector<8x1xf32>
    %167 = tpu.matmul %157, %166, %cst_49 {dimension_numbers = #tpu.dot_dimension_numbers<[1], [0], [0], [1], [0, 0, 1, 1], [], []>} : vector<8x32xbf16>, vector<32x1xbf16>, vector<8x1xf32> -> vector<8x1xf32>
    %168 = vector.extract_strided_slice %155 {offsets = [0, 4], sizes = [8, 4], strides = [1, 1]} : vector<8x8xf32> to vector<8x4xf32>
    %169 = arith.truncf %168 : vector<8x4xf32> to vector<8x4xbf16>
    %cst_50 = arith.constant dense<0.000000e+00> : vector<8x4xf32>
    %170 = tpu.matmul %169, %156, %cst_50 {dimension_numbers = #tpu.dot_dimension_numbers<[1], [0], [0], [1], [0, 0, 1, 1], [], []>} : vector<8x4xbf16>, vector<4x4xbf16>, vector<8x4xf32> -> vector<8x4xf32>
    %171 = vector.extract_strided_slice %170 {offsets = [0, 0], sizes = [8, 1], strides = [1, 1]} : vector<8x4xf32> to vector<8x1xf32>
    %172 = vector.extract_strided_slice %170 {offsets = [0, 1], sizes = [8, 1], strides = [1, 1]} : vector<8x4xf32> to vector<8x1xf32>
    %173 = vector.extract_strided_slice %170 {offsets = [0, 2], sizes = [8, 1], strides = [1, 1]} : vector<8x4xf32> to vector<8x1xf32>
    %174 = vector.extract_strided_slice %170 {offsets = [0, 3], sizes = [8, 1], strides = [1, 1]} : vector<8x4xf32> to vector<8x1xf32>
    %175 = tpu.concatenate %171, %172, %173, %174 in 0 : vector<8x1xf32>, vector<8x1xf32>, vector<8x1xf32>, vector<8x1xf32> -> vector<32x1xf32>
    %176 = arith.truncf %175 : vector<32x1xf32> to vector<32x1xbf16>
    %cst_51 = arith.constant dense<0.000000e+00> : vector<8x1xf32>
    %177 = tpu.matmul %157, %176, %cst_51 {dimension_numbers = #tpu.dot_dimension_numbers<[1], [0], [0], [1], [0, 0, 1, 1], [], []>} : vector<8x32xbf16>, vector<32x1xbf16>, vector<8x1xf32> -> vector<8x1xf32>
    %178 = tpu.concatenate %167, %177 in 1 : vector<8x1xf32>, vector<8x1xf32> -> vector<8x2xf32>
    %c3 = arith.constant 3 : index
    %c0_52 = arith.constant 0 : index
    %c0_53 = arith.constant 0 : index
    %179 = vector.load %arg8[%c3, %c0_52, %c0_53] : memref<4x8x3xf32, #tpu.memory_space<vmem>>, vector<1x8x3xf32>
    %180 = vector.shape_cast %179 : vector<1x8x3xf32> to vector<8x3xf32>
    %181 = vector.extract_strided_slice %180 {offsets = [0, 0], sizes = [8, 1], strides = [1, 1]} : vector<8x3xf32> to vector<8x1xf32>
    %182 = vector.broadcast %181 : vector<8x1xf32> to vector<8x2xf32>
    %183 = arith.addf %178, %182 : vector<8x2xf32>
    %cst_54 = arith.constant 0.000000e+00 : f32
    %184 = vector.broadcast %cst_54 : f32 to vector<8x2xf32>
    %185 = arith.maximumf %183, %184 : vector<8x2xf32>
    %cst_55 = arith.constant dense<0.000000e+00> : vector<8xf32>
    %186 = vector.multi_reduction <add>, %185, %cst_55 [1] : vector<8x2xf32> to vector<8xf32>
    %187 = vector.shape_cast %186 : vector<8xf32> to vector<8x1xf32>
    %cst_56 = arith.constant 5.000000e-01 : f32
    %188 = vector.broadcast %cst_56 : f32 to vector<8x1xf32>
    %189 = arith.mulf %187, %188 : vector<8x1xf32>
    %190 = vector.broadcast %189 : vector<8x1xf32> to vector<8x2xf32>
    %191 = arith.subf %185, %190 : vector<8x2xf32>
    %192 = arith.mulf %191, %191 : vector<8x2xf32>
    %cst_57 = arith.constant dense<0.000000e+00> : vector<8xf32>
    %193 = vector.multi_reduction <add>, %192, %cst_57 [1] : vector<8x2xf32> to vector<8xf32>
    %194 = vector.shape_cast %193 : vector<8xf32> to vector<8x1xf32>
    %cst_58 = arith.constant 5.000000e-01 : f32
    %195 = vector.broadcast %cst_58 : f32 to vector<8x1xf32>
    %196 = arith.mulf %194, %195 : vector<8x1xf32>
    %cst_59 = arith.constant 9.99999974E-6 : f32
    %197 = vector.broadcast %cst_59 : f32 to vector<8x1xf32>
    %198 = arith.addf %196, %197 : vector<8x1xf32>
    %199 = math.rsqrt %198 : vector<8x1xf32>
    %200 = vector.broadcast %199 : vector<8x1xf32> to vector<8x2xf32>
    %201 = arith.mulf %191, %200 : vector<8x2xf32>
    %202 = vector.extract_strided_slice %180 {offsets = [0, 1], sizes = [8, 1], strides = [1, 1]} : vector<8x3xf32> to vector<8x1xf32>
    %203 = vector.broadcast %202 : vector<8x1xf32> to vector<8x2xf32>
    %204 = arith.mulf %201, %203 : vector<8x2xf32>
    %205 = vector.extract_strided_slice %180 {offsets = [0, 2], sizes = [8, 1], strides = [1, 1]} : vector<8x3xf32> to vector<8x1xf32>
    %206 = vector.broadcast %205 : vector<8x1xf32> to vector<8x2xf32>
    %207 = arith.addf %204, %206 : vector<8x2xf32>
    %c0_60 = arith.constant 0 : index
    %c0_61 = arith.constant 0 : index
    %208 = vector.load %arg9[%c0_60, %c0_61] : memref<5x8xbf16, #tpu.memory_space<vmem>>, vector<5x8xbf16>
    %209 = arith.truncf %207 : vector<8x2xf32> to vector<8x2xbf16>
    %cst_62 = arith.constant dense<0.000000e+00> : vector<5x2xf32>
    %210 = tpu.matmul %208, %209, %cst_62 {dimension_numbers = #tpu.dot_dimension_numbers<[1], [0], [0], [1], [0, 0, 1, 1], [], []>} : vector<5x8xbf16>, vector<8x2xbf16>, vector<5x2xf32> -> vector<5x2xf32>
    %c0_63 = arith.constant 0 : index
    %c0_64 = arith.constant 0 : index
    %211 = vector.load %arg10[%c0_63, %c0_64] : memref<5x1xf32, #tpu.memory_space<vmem>>, vector<5x1xf32>
    %212 = vector.broadcast %211 : vector<5x1xf32> to vector<5x2xf32>
    %213 = arith.addf %210, %212 : vector<5x2xf32>
    %c0_65 = arith.constant 0 : index
    %c0_66 = arith.constant 0 : index
    %214 = vector.load %arg11[%c0_65, %c0_66] : memref<5x2xf32, #tpu.memory_space<vmem>>, vector<5x2xf32>
    tpu.vector_store %arg11[%c0_65, %c0_66], %213 {strides = array<i32>} : memref<5x2xf32, #tpu.memory_space<vmem>>, vector<5x2xf32>,
    return
  }
}

</mosaic_0001>

<llo_original>
// kernel: forward.1
$region0: #{forward.1}
  #allocation0 [shape = 'u32[]', space=smem, size = 0x4, offset = 0x4, fixed_abs, tag = 'smem constant byte address 0x4 - core index']
  #allocation1 [shape = 'u32[144,128]{1,0:T(1,128)}', space=vmem, size = 0x12000, scoped, tag = 'internal scratch']
  %s0 = inlined_call_operand.vmem [shape: bf16[9,338], index: 0, kind: input, shape index: {}]
  %s1 = inlined_call_operand.vmem [shape: bf16[8,9], index: 1, kind: input, shape index: {}]
  %s2 = inlined_call_operand.vmem [shape: bf16[169,324], index: 2, kind: input, shape index: {}]
  %s3 = inlined_call_operand.vmem [shape: bf16[8,72], index: 3, kind: input, shape index: {}]
  %s4 = inlined_call_operand.vmem [shape: bf16[36,36], index: 4, kind: input, shape index: {}]
  %s5 = inlined_call_operand.vmem [shape: bf16[8,72], index: 5, kind: input, shape index: {}]
  %s6 = inlined_call_operand.vmem [shape: bf16[4,4], index: 6, kind: input, shape index: {}]
  %s7 = inlined_call_operand.vmem [shape: bf16[8,32], index: 7, kind: input, shape index: {}]
  %s8 = inlined_call_operand.vmem [shape: f32[4,8,3], index: 8, kind: input, shape index: {}]
  %s9 = inlined_call_operand.vmem [shape: bf16[5,8], index: 9, kind: input, shape index: {}]
  %s10 = inlined_call_operand.vmem [shape: f32[5,1], index: 10, kind: input, shape index: {}]
  %s11 = inlined_call_operand.vmem [shape: f32[5,2], index: 11, kind: output, shape index: {}]
  %s12 = sld [smem:[#allocation0]]
  $region54: #{forward.1} parent=0
    _
  %s14 = ssub.s32 1, %s12
  %s15 = scalar_select 0, %s14, %s12
  // Predicated region
  $region2: #{forward.1} parent=0 // pred_check
    _
  $region3: #{forward.1} parent=0 // pred_check_branch
    %17 = sbr.rel (0) target = $region5
  $region4: #{forward.1} parent=0 // pred_region
    _
  $region5: #{forward.1} parent=0 // pred_fallthru
    _
  // Predicated region
  $region6: #{forward.1} parent=0 // pred_check
    _
  $region7: #{forward.1} parent=0 // pred_check_branch
    %19 = sbr.rel (0) target = $region9
  $region8: #{forward.1} parent=0 // pred_region
    _
  $region9: #{forward.1} parent=0 // pred_fallthru
    _
  // Predicated region
  $region10: #{forward.1} parent=0 // pred_check
    _
  $region11: #{forward.1} parent=0 // pred_check_branch
    %21 = sbr.rel (0) target = $region13
  $region12: #{forward.1} parent=0 // pred_region
    _
  $region13: #{forward.1} parent=0 // pred_fallthru
    _
  // Predicated region
  $region14: #{forward.1} parent=0 // pred_check
    _
  $region15: #{forward.1} parent=0 // pred_check_branch
    %23 = sbr.rel (0) target = $region17
  $region16: #{forward.1} parent=0 // pred_region
    _
  $region17: #{forward.1} parent=0 // pred_fallthru
    _
  // Predicated region
  $region18: #{forward.1} parent=0 // pred_check
    _
  $region19: #{forward.1} parent=0 // pred_check_branch
    %25 = sbr.rel (0) target = $region21
  $region20: #{forward.1} parent=0 // pred_region
    _
  $region21: #{forward.1} parent=0 // pred_fallthru
    _
  // Predicated region
  $region22: #{forward.1} parent=0 // pred_check
    _
  $region23: #{forward.1} parent=0 // pred_check_branch
    %27 = sbr.rel (0) target = $region25
  $region24: #{forward.1} parent=0 // pred_region
    _
  $region25: #{forward.1} parent=0 // pred_fallthru
    _
  // Predicated region
  $region26: #{forward.1} parent=0 // pred_check
    _
  $region27: #{forward.1} parent=0 // pred_check_branch
    %29 = sbr.rel (0) target = $region29
  $region28: #{forward.1} parent=0 // pred_region
    _
  $region29: #{forward.1} parent=0 // pred_fallthru
    _
  // Predicated region
  $region30: #{forward.1} parent=0 // pred_check
    _
  $region31: #{forward.1} parent=0 // pred_check_branch
    %31 = sbr.rel (0) target = $region33
  $region32: #{forward.1} parent=0 // pred_region
    _
  $region33: #{forward.1} parent=0 // pred_fallthru
    _
  // Predicated region
  $region34: #{forward.1} parent=0 // pred_check
    _
  $region35: #{forward.1} parent=0 // pred_check_branch
    %33 = sbr.rel (0) target = $region37
  $region36: #{forward.1} parent=0 // pred_region
    _
  $region37: #{forward.1} parent=0 // pred_fallthru
    _
  // Predicated region
  $region38: #{forward.1} parent=0 // pred_check
    _
  $region39: #{forward.1} parent=0 // pred_check_branch
    %35 = sbr.rel (0) target = $region41
  $region40: #{forward.1} parent=0 // pred_region
    _
  $region41: #{forward.1} parent=0 // pred_fallthru
    _
  // Predicated region
  $region42: #{forward.1} parent=0 // pred_check
    _
  $region43: #{forward.1} parent=0 // pred_check_branch
    %37 = sbr.rel (0) target = $region45
  $region44: #{forward.1} parent=0 // pred_region
    _
  $region45: #{forward.1} parent=0 // pred_fallthru
    _
  %v39 = vld [vmem:[%s1] sm:$0xf]
  %v40 = vld [vmem:[%s0] sm:$0xff]
  %v41 = vld [vmem:[%s0 + $0x8] sm:$0xf]
  %v42 = vld [vmem:[%s0 + $0xc] sm:$0x11]
  %v43 = vld [vmem:[%s0 + $0x14] sm:$0x1]
  %v44 = vld [vmem:[%s8] sm:$0xff]
  %46 = vset.pattern.permute.xlu0 0
  %47 = vperm.xlu0 %46, %v44
  %v48 = vpop.permute.xlu0 %47
  %v54 = vunpack.c.l.b16 %v40
  %v55 = vunpack.c.h.b16 %v40
  %v56 = vunpack.c.l.b16 %v41
  %v57 = vunpack.c.l.b16 %v42
  %v58 = vunpack.c.h.b16 %v42
  %v59 = vunpack.c.l.b16 %v43
  %v60 = vpack.c.b16 %v57, %v54
  %v61 = vpack.c.b16 %v58, %v55
  %v62 = vpack.c.b16 %v59, %v56
  %vm63 = vcmask 72704
  %v65 = vsel %vm63, %v39, 0
  %vm67 = vcmask 1043456
  %vm68 = vcmask 1044480
  %v69 = vsel %vm67, 4294967295, 65535
  %v70 = vsel %vm68, %v69, 0
  %v72 = vand.u32 %v60, %v70
  %v75 = vand.u32 %v61, %v70
  %v78 = vand.u32 %v62, %v70
  %80 = vmatprep.subr.bf16.mxu0 %v75
  %81 = vmatpush1.bf16.msra.mxu0 %v72
  %82 = vmatprep.subr.bf16.mxu0 0
  %83 = vmatpush1.bf16.msra.mxu0 0
  %84 = vmatprep.subr.bf16.mxu0 0
  %85 = vmatpush1.bf16.msra.mxu0 0
  %86 = vmatprep.subr.bf16.mxu0 0
  %87 = vmatpush1.bf16.msra.mxu0 0
  %88 = vmatprep.subr.bf16.mxu0 0
  %89 = vmatpush1.bf16.msra.mxu0 0
  %90 = vmatprep.subr.bf16.mxu0 0
  %91 = vmatpush1.bf16.msra.mxu0 0
  %92 = vmatprep.subr.bf16.mxu0 0
  %93 = vmatpush1.bf16.msra.mxu0 0
  %94 = vmatprep.subr.bf16.mxu0 0
  %95 = vmatpush1.bf16.msra.mxu0 0
  %96 = vmatprep.subr.bf16.mxu0 0
  %97 = vmatpush1.bf16.msra.mxu0 0
  %98 = vmatprep.subr.bf16.mxu0 0
  %99 = vmatpush1.bf16.msra.mxu0 0
  %100 = vmatprep.subr.bf16.mxu0 0
  %101 = vmatpush1.bf16.msra.mxu0 0
  %102 = vmatprep.subr.bf16.mxu0 0
  %103 = vmatpush1.bf16.msra.mxu0 0
  %104 = vmatprep.subr.bf16.mxu0 0
  %105 = vmatpush1.bf16.msra.mxu0 0
  %106 = vmatprep.subr.bf16.mxu0 0
  %107 = vmatpush1.bf16.msra.mxu0 0
  %108 = vmatprep.subr.bf16.mxu0 0
  %109 = vmatpush1.bf16.msra.mxu0 0
  %110 = vmatprep.subr.bf16.mxu0 0
  %111 = vmatpush1.bf16.msra.mxu0 0
  %112 = vmatprep.mubr.bf16.mxu0 0
  %113 = vmatmul.mubr.bf16.gmra.mrb[0].mxu0 %v65
  %v114 = vpop.f32.mrb[0].mxu0
  %v115 = vadd.f32 %v48, %v114
  %v116 = vpop.f32.mrb[0].mxu0
  %v117 = vadd.f32 %v48, %v116
  %v118 = vpop.f32.mrb[0].mxu0
  %v119 = vpop.f32.mrb[0].mxu0
  %120 = vdwg.mxu0
  %121 = vmatprep.subr.bf16.mxu0 0
  %122 = vmatpush1.bf16.msra.mxu0 %v78
  %123 = vmatprep.subr.bf16.mxu0 0
  %124 = vmatpush1.bf16.msra.mxu0 0
  %125 = vmatprep.subr.bf16.mxu0 0
  %126 = vmatpush1.bf16.msra.mxu0 0
  %127 = vmatprep.subr.bf16.mxu0 0
  %128 = vmatpush1.bf16.msra.mxu0 0
  %129 = vmatprep.subr.bf16.mxu0 0
  %130 = vmatpush1.bf16.msra.mxu0 0
  %131 = vmatprep.subr.bf16.mxu0 0
  %132 = vmatpush1.bf16.msra.mxu0 0
  %133 = vmatprep.subr.bf16.mxu0 0
  %134 = vmatpush1.bf16.msra.mxu0 0
  %135 = vmatprep.subr.bf16.mxu0 0
  %136 = vmatpush1.bf16.msra.mxu0 0
  %137 = vmatprep.subr.bf16.mxu0 0
  %138 = vmatpush1.bf16.msra.mxu0 0
  %139 = vmatprep.subr.bf16.mxu0 0
  %140 = vmatpush1.bf16.msra.mxu0 0
  %141 = vmatprep.subr.bf16.mxu0 0
  %142 = vmatpush1.bf16.msra.mxu0 0
  %143 = vmatprep.subr.bf16.mxu0 0
  %144 = vmatpush1.bf16.msra.mxu0 0
  %145 = vmatprep.subr.bf16.mxu0 0
  %146 = vmatpush1.bf16.msra.mxu0 0
  %147 = vmatprep.subr.bf16.mxu0 0
  %148 = vmatpush1.bf16.msra.mxu0 0
  %149 = vmatprep.subr.bf16.mxu0 0
  %150 = vmatpush1.bf16.msra.mxu0 0
  %151 = vmatprep.subr.bf16.mxu0 0
  %152 = vmatpush1.bf16.msra.mxu0 0
  %153 = vmatprep.mubr.bf16.mxu0 0
  %154 = vmatmul.mubr.bf16.gmra.mrb[0].mxu0 %v65
  %v155 = vpop.f32.mrb[0].mxu0
  %v156 = vadd.f32 %v48, %v155
  %v157 = vpop.f32.mrb[0].mxu0
  %v158 = vpop.f32.mrb[0].mxu0
  %v159 = vpop.f32.mrb[0].mxu0
  %160 = vdwg.mxu0
  %v161 = vmax.f32 %v115, 0.0
  %v162 = vmax.f32 %v117, 0.0
  %v163 = vmax.f32 %v156, 0.0
  %v164 = vadd.f32 %v161, %v162
  %vm165 = vcmask 670720
  %v166 = vsel %vm165, %v163, 0.0
  %v167 = vadd.f32 %v164, %v166
  %168 = vadd.xlane.f32.xlu0 %v167
  %v169 = vpop.xlane.xlu0 %168
  %v170 = vmul.f32 %v169, 0.00295858
  %v171 = vsub.f32 %v161, %v170
  %v172 = vsub.f32 %v162, %v170
  %v173 = vsub.f32 %v163, %v170
  %v174 = vmul.f32 %v171, %v171
  %v175 = vmul.f32 %v172, %v172
  %v176 = vmul.f32 %v173, %v173
  %v177 = vadd.f32 %v174, %v175
  %v178 = vsel %vm165, %v176, 0.0
  %v179 = vadd.f32 %v177, %v178
  %180 = vadd.xlane.f32.xlu0 %v179
  %v181 = vpop.xlane.xlu0 %180
  %v182 = vmul.f32 %v181, 0.00295858
  %v183 = vadd.f32 %v182, 1e-05
  %v184 = vrsqrt.pop %v183
  %v185 = vmul.f32 %v171, %v184
  %v186 = vmul.f32 %v172, %v184
  %v187 = vmul.f32 %v173, %v184
  %188 = vset.pattern.permute.xlu0 1
  %189 = vperm.xlu0 %188, %v44
  %v190 = vpop.permute.xlu0 %189
  %v192 = vmul.f32 %v185, %v190
  %v193 = vmul.f32 %v186, %v190
  %v194 = vmul.f32 %v187, %v190
  %195 = vset.pattern.permute.xlu0 2
  %196 = vperm.xlu0 %195, %v44
  %v197 = vpop.permute.xlu0 %196
  %v199 = vadd.f32 %v192, %v197
  %v200 = vadd.f32 %v193, %v197
  %v201 = vadd.f32 %v194, %v197
  %v202 = vld [vmem:[%s2] sm:$0xff]
  %v203 = vld [vmem:[%s2 + $0x8] sm:$0xf]
  %v204 = vld [vmem:[%s2 + $0xc] sm:$0xff]
  %v205 = vld [vmem:[%s2 + $0x14] sm:$0xf]
  %v206 = vld [vmem:[%s2 + $0x18] sm:$0xff]
  %v207 = vld [vmem:[%s2 + $0x20] sm:$0xf]
  %v208 = vld [vmem:[%s2 + $0x24] sm:$0xff]
  %v209 = vld [vmem:[%s2 + $0x2c] sm:$0xf]
  %v210 = vld [vmem:[%s2 + $0x30] sm:$0xff]
  %v211 = vld [vmem:[%s2 + $0x38] sm:$0xf]
  %v212 = vld [vmem:[%s2 + $0x3c] sm:$0xff]
  %v213 = vld [vmem:[%s2 + $0x44] sm:$0xf]
  %v214 = vld [vmem:[%s2 + $0x48] sm:$0xff]
  %v215 = vld [vmem:[%s2 + $0x50] sm:$0xf]
  %v216 = vld [vmem:[%s2 + $0x54] sm:$0xff]
  %v217 = vld [vmem:[%s2 + $0x5c] sm:$0xf]
  %v218 = vld [vmem:[%s2 + $0x60] sm:$0xff]
  %v219 = vld [vmem:[%s2 + $0x68] sm:$0xf]
  %v220 = vld [vmem:[%s2 + $0x6c] sm:$0xff]
  %v221 = vld [vmem:[%s2 + $0x74] sm:$0xf]
  %v222 = vld [vmem:[%s2 + $0x78] sm:$0xff]
  %v223 = vld [vmem:[%s2 + $0x80] sm:$0xf]
  %v224 = vld [vmem:[%s2 + $0x84] sm:$0xff]
  %v225 = vld [vmem:[%s2 + $0x8c] sm:$0xf]
  %v226 = vld [vmem:[%s2 + $0x90] sm:$0xff]
  %v227 = vld [vmem:[%s2 + $0x98] sm:$0xf]
  %v228 = vld [vmem:[%s2 + $0x9c] sm:$0xff]
  %v229 = vld [vmem:[%s2 + $0xa4] sm:$0xf]
  %v230 = vld [vmem:[%s2 + $0xa8] sm:$0xff]
  %v231 = vld [vmem:[%s2 + $0xb0] sm:$0xf]
  %v232 = vld [vmem:[%s2 + $0xb4] sm:$0xff]
  %v233 = vld [vmem:[%s2 + $0xbc] sm:$0xf]
  %v234 = vld [vmem:[%s2 + $0xc0] sm:$0xff]
  %v235 = vld [vmem:[%s2 + $0xc8] sm:$0xf]
  %v236 = vld [vmem:[%s2 + $0xcc] sm:$0xff]
  %v237 = vld [vmem:[%s2 + $0xd4] sm:$0xf]
  %v238 = vld [vmem:[%s2 + $0xd8] sm:$0xff]
  %v239 = vld [vmem:[%s2 + $0xe0] sm:$0xf]
  %v240 = vld [vmem:[%s2 + $0xe4] sm:$0xff]
  %v241 = vld [vmem:[%s2 + $0xec] sm:$0xf]
  %v242 = vld [vmem:[%s2 + $0xf0] sm:$0xff]
  %v243 = vld [vmem:[%s2 + $0xf8] sm:$0xf]
  %v244 = vld [vmem:[%s2 + $0xfc] sm:$0x11]
  %v245 = vld [vmem:[%s2 + $0x104] sm:$0x1]
  %v246 = vld [vmem:[%s3] sm:$0xf]
  %v247 = vpack.c.bf16 %v199, %v199
  %v248 = vpack.c.bf16 %v200, %v200
  %v293 = vunpack.c.l.b16 %v202
  %v294 = vunpack.c.h.b16 %v202
  %v295 = vunpack.c.l.b16 %v203
  %v296 = vunpack.c.l.b16 %v204
  %v297 = vunpack.c.h.b16 %v204
  %v298 = vunpack.c.l.b16 %v205
  %v299 = vunpack.c.l.b16 %v206
  %v300 = vunpack.c.h.b16 %v206
  %v301 = vunpack.c.l.b16 %v207
  %v302 = vunpack.c.l.b16 %v208
  %v303 = vunpack.c.h.b16 %v208
  %v304 = vunpack.c.l.b16 %v209
  %v305 = vunpack.c.l.b16 %v210
  %v306 = vunpack.c.h.b16 %v210
  %v307 = vunpack.c.l.b16 %v211
  %v308 = vunpack.c.l.b16 %v212
  %v309 = vunpack.c.h.b16 %v212
  %v310 = vunpack.c.l.b16 %v213
  %v311 = vunpack.c.l.b16 %v214
  %v312 = vunpack.c.h.b16 %v214
  %v313 = vunpack.c.l.b16 %v215
  %v314 = vunpack.c.l.b16 %v216
  %v315 = vunpack.c.h.b16 %v216
  %v316 = vunpack.c.l.b16 %v217
  %v317 = vunpack.c.l.b16 %v218
  %v318 = vunpack.c.h.b16 %v218
  %v319 = vunpack.c.l.b16 %v219
  %v320 = vunpack.c.l.b16 %v220
  %v321 = vunpack.c.h.b16 %v220
  %v322 = vunpack.c.l.b16 %v221
  %v323 = vunpack.c.l.b16 %v222
  %v324 = vunpack.c.h.b16 %v222
  %v325 = vunpack.c.l.b16 %v223
  %v326 = vunpack.c.l.b16 %v224
  %v327 = vunpack.c.h.b16 %v224
  %v328 = vunpack.c.l.b16 %v225
  %v329 = vunpack.c.l.b16 %v226
  %v330 = vunpack.c.h.b16 %v226
  %v331 = vunpack.c.l.b16 %v227
  %v332 = vunpack.c.l.b16 %v228
  %v333 = vunpack.c.h.b16 %v228
  %v334 = vunpack.c.l.b16 %v229
  %v335 = vunpack.c.l.b16 %v230
  %v336 = vunpack.c.h.b16 %v230
  %v337 = vunpack.c.l.b16 %v231
  %v338 = vunpack.c.l.b16 %v232
  %v339 = vunpack.c.h.b16 %v232
  %v340 = vunpack.c.l.b16 %v233
  %v341 = vunpack.c.l.b16 %v234
  %v342 = vunpack.c.h.b16 %v234
  %v343 = vunpack.c.l.b16 %v235
  %v344 = vunpack.c.l.b16 %v236
  %v345 = vunpack.c.h.b16 %v236
  %v346 = vunpack.c.l.b16 %v237
  %v347 = vunpack.c.l.b16 %v238
  %v348 = vunpack.c.h.b16 %v238
  %v349 = vunpack.c.l.b16 %v239
  %v350 = vunpack.c.l.b16 %v240
  %v351 = vunpack.c.h.b16 %v240
  %v352 = vunpack.c.l.b16 %v241
  %v353 = vunpack.c.l.b16 %v242
  %v354 = vunpack.c.h.b16 %v242
  %v355 = vunpack.c.l.b16 %v243
  %v356 = vunpack.c.l.b16 %v244
  %v357 = vunpack.c.h.b16 %v244
  %v358 = vunpack.c.l.b16 %v245
  %v359 = vpack.c.b16 %v296, %v293
  %v360 = vpack.c.b16 %v297, %v294
  %v361 = vpack.c.b16 %v298, %v295
  %v362 = vpack.c.b16 %v302, %v299
  %v363 = vpack.c.b16 %v303, %v300
  %v364 = vpack.c.b16 %v304, %v301
  %v365 = vpack.c.b16 %v308, %v305
  %v366 = vpack.c.b16 %v309, %v306
  %v367 = vpack.c.b16 %v310, %v307
  %v368 = vpack.c.b16 %v314, %v311
  %v369 = vpack.c.b16 %v315, %v312
  %v370 = vpack.c.b16 %v316, %v313
  %v371 = vpack.c.b16 %v320, %v317
  %v372 = vpack.c.b16 %v321, %v318
  %v373 = vpack.c.b16 %v322, %v319
  %v374 = vpack.c.b16 %v326, %v323
  %v375 = vpack.c.b16 %v327, %v324
  %v376 = vpack.c.b16 %v328, %v325
  %v377 = vpack.c.b16 %v332, %v329
  %v378 = vpack.c.b16 %v333, %v330
  %v379 = vpack.c.b16 %v334, %v331
  %v380 = vpack.c.b16 %v338, %v335
  %v381 = vpack.c.b16 %v339, %v336
  %v382 = vpack.c.b16 %v340, %v337
  %v383 = vpack.c.b16 %v344, %v341
  %v384 = vpack.c.b16 %v345, %v342
  %v385 = vpack.c.b16 %v346, %v343
  %v386 = vpack.c.b16 %v350, %v347
  %v387 = vpack.c.b16 %v351, %v348
  %v388 = vpack.c.b16 %v352, %v349
  %v389 = vpack.c.b16 %v356, %v353
  %v390 = vpack.c.b16 %v357, %v354
  %v391 = vpack.c.b16 %v358, %v355
  %vm422 = vcmask 334848
  %v424 = vsel %vm422, %v248, 0
  %v427 = vand.u32 %v389, %v70
  %v430 = vand.u32 %v390, %v70
  %v433 = vand.u32 %v391, %v70
  %435 = vmatprep.subr.bf16.mxu0 %v360
  %436 = vmatpush1.bf16.msra.mxu0 %v359
  %437 = vmatprep.subr.bf16.mxu0 %v363
  %438 = vmatpush1.bf16.msra.mxu0 %v362
  %439 = vmatprep.subr.bf16.mxu0 %v366
  %440 = vmatpush1.bf16.msra.mxu0 %v365
  %441 = vmatprep.subr.bf16.mxu0 %v369
  %442 = vmatpush1.bf16.msra.mxu0 %v368
  %443 = vmatprep.subr.bf16.mxu0 %v372
  %444 = vmatpush1.bf16.msra.mxu0 %v371
  %445 = vmatprep.subr.bf16.mxu0 %v375
  %446 = vmatpush1.bf16.msra.mxu0 %v374
  %447 = vmatprep.subr.bf16.mxu0 %v378
  %448 = vmatpush1.bf16.msra.mxu0 %v377
  %449 = vmatprep.subr.bf16.mxu0 %v381
  %450 = vmatpush1.bf16.msra.mxu0 %v380
  %451 = vmatprep.subr.bf16.mxu0 %v384
  %452 = vmatpush1.bf16.msra.mxu0 %v383
  %453 = vmatprep.subr.bf16.mxu0 %v387
  %454 = vmatpush1.bf16.msra.mxu0 %v386
  %455 = vmatprep.subr.bf16.mxu0 %v430
  %456 = vmatpush1.bf16.msra.mxu0 %v427
  %457 = vmatprep.subr.bf16.mxu0 0
  %458 = vmatpush1.bf16.msra.mxu0 0
  %459 = vmatprep.subr.bf16.mxu0 0
  %460 = vmatpush1.bf16.msra.mxu0 0
  %461 = vmatprep.subr.bf16.mxu0 0
  %462 = vmatpush1.bf16.msra.mxu0 0
  %463 = vmatprep.subr.bf16.mxu0 0
  %464 = vmatpush1.bf16.msra.mxu0 0
  %465 = vmatprep.subr.bf16.mxu0 0
  %466 = vmatpush1.bf16.msra.mxu0 0
  %467 = vmatprep.mubr.bf16.mxu0 %v424
  %468 = vmatmul.mubr.bf16.gmra.mrb[0].mxu0 %v247
  %v469 = vpop.f32.mrb[0].mxu0
  %v470 = vadd.f32 0.0, %v469
  %v471 = vpop.f32.mrb[0].mxu0
  %v472 = vadd.f32 0.0, %v471
  %v473 = vpop.f32.mrb[0].mxu0
  %v474 = vpop.f32.mrb[0].mxu0
  %475 = vdwg.mxu0
  %476 = vmatprep.subr.bf16.mxu0 0
  %477 = vmatpush1.bf16.msra.mxu0 %v361
  %478 = vmatprep.subr.bf16.mxu0 0
  %479 = vmatpush1.bf16.msra.mxu0 %v364
  %480 = vmatprep.subr.bf16.mxu0 0
  %481 = vmatpush1.bf16.msra.mxu0 %v367
  %482 = vmatprep.subr.bf16.mxu0 0
  %483 = vmatpush1.bf16.msra.mxu0 %v370
  %484 = vmatprep.subr.bf16.mxu0 0
  %485 = vmatpush1.bf16.msra.mxu0 %v373
  %486 = vmatprep.subr.bf16.mxu0 0
  %487 = vmatpush1.bf16.msra.mxu0 %v376
  %488 = vmatprep.subr.bf16.mxu0 0
  %489 = vmatpush1.bf16.msra.mxu0 %v379
  %490 = vmatprep.subr.bf16.mxu0 0
  %491 = vmatpush1.bf16.msra.mxu0 %v382
  %492 = vmatprep.subr.bf16.mxu0 0
  %493 = vmatpush1.bf16.msra.mxu0 %v385
  %494 = vmatprep.subr.bf16.mxu0 0
  %495 = vmatpush1.bf16.msra.mxu0 %v388
  %496 = vmatprep.subr.bf16.mxu0 0
  %497 = vmatpush1.bf16.msra.mxu0 %v433
  %498 = vmatprep.subr.bf16.mxu0 0
  %499 = vmatpush1.bf16.msra.mxu0 0
  %500 = vmatprep.subr.bf16.mxu0 0
  %501 = vmatpush1.bf16.msra.mxu0 0
  %502 = vmatprep.subr.bf16.mxu0 0
  %503 = vmatpush1.bf16.msra.mxu0 0
  %504 = vmatprep.subr.bf16.mxu0 0
  %505 = vmatpush1.bf16.msra.mxu0 0
  %506 = vmatprep.subr.bf16.mxu0 0
  %507 = vmatpush1.bf16.msra.mxu0 0
  %508 = vmatprep.mubr.bf16.mxu0 %v424
  %509 = vmatmul.mubr.bf16.gmra.mrb[0].mxu0 %v247
  %v510 = vpop.f32.mrb[0].mxu0
  %v511 = vadd.f32 0.0, %v510
  %v512 = vpop.f32.mrb[0].mxu0
  %v513 = vpop.f32.mrb[0].mxu0
  %v514 = vpop.f32.mrb[0].mxu0
  %515 = vdwg.mxu0
  %517 = vrot.lane.b32.xlu0 %v470, 92
  %v518 = vpop.permute.xlu0 %517
  %520 = vrot.lane.b32.xlu0 %v470, 56
  %v521 = vpop.permute.xlu0 %520
  %524 = vrot.lane.b32.xlu0 %v470, 20
  %v525 = vpop.permute.xlu0 %524
  %526 = vrot.lane.b32.xlu0 %v472, 20
  %v527 = vpop.permute.xlu0 %526
  %vm528 = vcmask 162816
  %v529 = vsel %vm528, %v525, %v527
  %531 = vrot.lane.b32.xlu0 %v472, 112
  %v532 = vpop.permute.xlu0 %531
  %534 = vrot.lane.b32.xlu0 %v472, 76
  %v535 = vpop.permute.xlu0 %534
  %537 = vrot.lane.b32.xlu0 %v472, 40
  %v538 = vpop.permute.xlu0 %537
  %541 = vrot.lane.b32.xlu0 %v472, 4
  %v542 = vpop.permute.xlu0 %541
  %543 = vrot.lane.b32.xlu0 %v511, 4
  %v544 = vpop.permute.xlu0 %543
  %vm545 = vcmask 31744
  %v546 = vsel %vm545, %v542, %v544
  %548 = vrot.lane.b32.xlu0 %v511, 96
  %v549 = vpop.permute.xlu0 %548
  %v551 = vpack.c.bf16 %v518, %v470
  %v552 = vpack.c.bf16 %v529, %v521
  %v553 = vpack.c.bf16 %v535, %v532
  %v554 = vpack.c.bf16 %v546, %v538
  %v555 = vpack.c.bf16 %v549, %v549
  %vm556 = vcmask 588800
  %v558 = vsel %vm556, %v246, 0
  %v561 = vsel %vm67, %v555, 0
  %563 = vmatprep.subr.bf16.mxu0 0
  %564 = vmatpush1.bf16.msra.mxu0 %v551
  %565 = vmatprep.subr.bf16.mxu0 0
  %566 = vmatpush1.bf16.msra.mxu0 %v552
  %567 = vmatprep.subr.bf16.mxu0 0
  %568 = vmatpush1.bf16.msra.mxu0 %v553
  %569 = vmatprep.subr.bf16.mxu0 0
  %570 = vmatpush1.bf16.msra.mxu0 %v554
  %571 = vmatprep.subr.bf16.mxu0 0
  %572 = vmatpush1.bf16.msra.mxu0 %v561
  %573 = vmatprep.subr.bf16.mxu0 0
  %574 = vmatpush1.bf16.msra.mxu0 0
  %575 = vmatprep.subr.bf16.mxu0 0
  %576 = vmatpush1.bf16.msra.mxu0 0
  %577 = vmatprep.subr.bf16.mxu0 0
  %578 = vmatpush1.bf16.msra.mxu0 0
  %579 = vmatprep.subr.bf16.mxu0 0
  %580 = vmatpush1.bf16.msra.mxu0 0
  %581 = vmatprep.subr.bf16.mxu0 0
  %582 = vmatpush1.bf16.msra.mxu0 0
  %583 = vmatprep.subr.bf16.mxu0 0
  %584 = vmatpush1.bf16.msra.mxu0 0
  %585 = vmatprep.subr.bf16.mxu0 0
  %586 = vmatpush1.bf16.msra.mxu0 0
  %587 = vmatprep.subr.bf16.mxu0 0
  %588 = vmatpush1.bf16.msra.mxu0 0
  %589 = vmatprep.subr.bf16.mxu0 0
  %590 = vmatpush1.bf16.msra.mxu0 0
  %591 = vmatprep.subr.bf16.mxu0 0
  %592 = vmatpush1.bf16.msra.mxu0 0
  %593 = vmatprep.subr.bf16.mxu0 0
  %594 = vmatpush1.bf16.msra.mxu0 0
  %595 = vmatprep.mubr.bf16.mxu0 0
  %596 = vmatmul.mubr.bf16.gmra.mrb[0].mxu0 %v558
  %v597 = vpop.f32.mrb[0].mxu0
  %v598 = vadd.f32 0.0, %v597
  %v599 = vpop.f32.mrb[0].mxu0
  %v600 = vpop.f32.mrb[0].mxu0
  %v601 = vpop.f32.mrb[0].mxu0
  %602 = vdwg.mxu0
  %v603 = vpack.c.bf16 %v201, %v201
  %606 = vrot.lane.b32.xlu0 %v248, 87
  %v607 = vpop.permute.xlu0 %606
  %608 = vrot.lane.b32.xlu0 %v603, 87
  %v609 = vpop.permute.xlu0 %608
  %vm610 = vcmask 711680
  %v611 = vsel %vm610, %v607, %v609
  %v614 = vsel %vm422, %v609, 0
  %616 = vmatprep.subr.bf16.mxu0 %v360
  %617 = vmatpush1.bf16.msra.mxu0 %v359
  %618 = vmatprep.subr.bf16.mxu0 %v363
  %619 = vmatpush1.bf16.msra.mxu0 %v362
  %620 = vmatprep.subr.bf16.mxu0 %v366
  %621 = vmatpush1.bf16.msra.mxu0 %v365
  %622 = vmatprep.subr.bf16.mxu0 %v369
  %623 = vmatpush1.bf16.msra.mxu0 %v368
  %624 = vmatprep.subr.bf16.mxu0 %v372
  %625 = vmatpush1.bf16.msra.mxu0 %v371
  %626 = vmatprep.subr.bf16.mxu0 %v375
  %627 = vmatpush1.bf16.msra.mxu0 %v374
  %628 = vmatprep.subr.bf16.mxu0 %v378
  %629 = vmatpush1.bf16.msra.mxu0 %v377
  %630 = vmatprep.subr.bf16.mxu0 %v381
  %631 = vmatpush1.bf16.msra.mxu0 %v380
  %632 = vmatprep.subr.bf16.mxu0 %v384
  %633 = vmatpush1.bf16.msra.mxu0 %v383
  %634 = vmatprep.subr.bf16.mxu0 %v387
  %635 = vmatpush1.bf16.msra.mxu0 %v386
  %636 = vmatprep.subr.bf16.mxu0 %v430
  %637 = vmatpush1.bf16.msra.mxu0 %v427
  %638 = vmatprep.subr.bf16.mxu0 0
  %639 = vmatpush1.bf16.msra.mxu0 0
  %640 = vmatprep.subr.bf16.mxu0 0
  %641 = vmatpush1.bf16.msra.mxu0 0
  %642 = vmatprep.subr.bf16.mxu0 0
  %643 = vmatpush1.bf16.msra.mxu0 0
  %644 = vmatprep.subr.bf16.mxu0 0
  %645 = vmatpush1.bf16.msra.mxu0 0
  %646 = vmatprep.subr.bf16.mxu0 0
  %647 = vmatpush1.bf16.msra.mxu0 0
  %648 = vmatprep.mubr.bf16.mxu0 %v614
  %649 = vmatmul.mubr.bf16.gmra.mrb[0].mxu0 %v611
  %v650 = vpop.f32.mrb[0].mxu0
  %v651 = vadd.f32 0.0, %v650
  %v652 = vpop.f32.mrb[0].mxu0
  %v653 = vadd.f32 0.0, %v652
  %v654 = vpop.f32.mrb[0].mxu0
  %v655 = vpop.f32.mrb[0].mxu0
  %656 = vdwg.mxu0
  %657 = vmatprep.subr.bf16.mxu0 0
  %658 = vmatpush1.bf16.msra.mxu0 %v361
  %659 = vmatprep.subr.bf16.mxu0 0
  %660 = vmatpush1.bf16.msra.mxu0 %v364
  %661 = vmatprep.subr.bf16.mxu0 0
  %662 = vmatpush1.bf16.msra.mxu0 %v367
  %663 = vmatprep.subr.bf16.mxu0 0
  %664 = vmatpush1.bf16.msra.mxu0 %v370
  %665 = vmatprep.subr.bf16.mxu0 0
  %666 = vmatpush1.bf16.msra.mxu0 %v373
  %667 = vmatprep.subr.bf16.mxu0 0
  %668 = vmatpush1.bf16.msra.mxu0 %v376
  %669 = vmatprep.subr.bf16.mxu0 0
  %670 = vmatpush1.bf16.msra.mxu0 %v379
  %671 = vmatprep.subr.bf16.mxu0 0
  %672 = vmatpush1.bf16.msra.mxu0 %v382
  %673 = vmatprep.subr.bf16.mxu0 0
  %674 = vmatpush1.bf16.msra.mxu0 %v385
  %675 = vmatprep.subr.bf16.mxu0 0
  %676 = vmatpush1.bf16.msra.mxu0 %v388
  %677 = vmatprep.subr.bf16.mxu0 0
  %678 = vmatpush1.bf16.msra.mxu0 %v433
  %679 = vmatprep.subr.bf16.mxu0 0
  %680 = vmatpush1.bf16.msra.mxu0 0
  %681 = vmatprep.subr.bf16.mxu0 0
  %682 = vmatpush1.bf16.msra.mxu0 0
  %683 = vmatprep.subr.bf16.mxu0 0
  %684 = vmatpush1.bf16.msra.mxu0 0
  %685 = vmatprep.subr.bf16.mxu0 0
  %686 = vmatpush1.bf16.msra.mxu0 0
  %687 = vmatprep.subr.bf16.mxu0 0
  %688 = vmatpush1.bf16.msra.mxu0 0
  %689 = vmatprep.mubr.bf16.mxu0 %v614
  %690 = vmatmul.mubr.bf16.gmra.mrb[0].mxu0 %v611
  %v691 = vpop.f32.mrb[0].mxu0
  %v692 = vadd.f32 0.0, %v691
  %v693 = vpop.f32.mrb[0].mxu0
  %v694 = vpop.f32.mrb[0].mxu0
  %v695 = vpop.f32.mrb[0].mxu0
  %696 = vdwg.mxu0
  %698 = vrot.lane.b32.xlu0 %v651, 92
  %v699 = vpop.permute.xlu0 %698
  %701 = vrot.lane.b32.xlu0 %v651, 56
  %v702 = vpop.permute.xlu0 %701
  %705 = vrot.lane.b32.xlu0 %v651, 20
  %v706 = vpop.permute.xlu0 %705
  %707 = vrot.lane.b32.xlu0 %v653, 20
  %v708 = vpop.permute.xlu0 %707
  %v709 = vsel %vm528, %v706, %v708
  %711 = vrot.lane.b32.xlu0 %v653, 112
  %v712 = vpop.permute.xlu0 %711
  %714 = vrot.lane.b32.xlu0 %v653, 76
  %v715 = vpop.permute.xlu0 %714
  %717 = vrot.lane.b32.xlu0 %v653, 40
  %v718 = vpop.permute.xlu0 %717
  %721 = vrot.lane.b32.xlu0 %v653, 4
  %v722 = vpop.permute.xlu0 %721
  %723 = vrot.lane.b32.xlu0 %v692, 4
  %v724 = vpop.permute.xlu0 %723
  %v725 = vsel %vm545, %v722, %v724
  %727 = vrot.lane.b32.xlu0 %v692, 96
  %v728 = vpop.permute.xlu0 %727
  %v730 = vpack.c.bf16 %v699, %v651
  %v731 = vpack.c.bf16 %v709, %v702
  %v732 = vpack.c.bf16 %v715, %v712
  %v733 = vpack.c.bf16 %v725, %v718
  %v734 = vpack.c.bf16 %v728, %v728
  %v736 = vsel %vm67, %v734, 0
  %738 = vmatprep.subr.bf16.mxu0 0
  %739 = vmatpush1.bf16.msra.mxu0 %v730
  %740 = vmatprep.subr.bf16.mxu0 0
  %741 = vmatpush1.bf16.msra.mxu0 %v731
  %742 = vmatprep.subr.bf16.mxu0 0
  %743 = vmatpush1.bf16.msra.mxu0 %v732
  %744 = vmatprep.subr.bf16.mxu0 0
  %745 = vmatpush1.bf16.msra.mxu0 %v733
  %746 = vmatprep.subr.bf16.mxu0 0
  %747 = vmatpush1.bf16.msra.mxu0 %v736
  %748 = vmatprep.subr.bf16.mxu0 0
  %749 = vmatpush1.bf16.msra.mxu0 0
  %750 = vmatprep.subr.bf16.mxu0 0
  %751 = vmatpush1.bf16.msra.mxu0 0
  %752 = vmatprep.subr.bf16.mxu0 0
  %753 = vmatpush1.bf16.msra.mxu0 0
  %754 = vmatprep.subr.bf16.mxu0 0
  %755 = vmatpush1.bf16.msra.mxu0 0
  %756 = vmatprep.subr.bf16.mxu0 0
  %757 = vmatpush1.bf16.msra.mxu0 0
  %758 = vmatprep.subr.bf16.mxu0 0
  %759 = vmatpush1.bf16.msra.mxu0 0
  %760 = vmatprep.subr.bf16.mxu0 0
  %761 = vmatpush1.bf16.msra.mxu0 0
  %762 = vmatprep.subr.bf16.mxu0 0
  %763 = vmatpush1.bf16.msra.mxu0 0
  %764 = vmatprep.subr.bf16.mxu0 0
  %765 = vmatpush1.bf16.msra.mxu0 0
  %766 = vmatprep.subr.bf16.mxu0 0
  %767 = vmatpush1.bf16.msra.mxu0 0
  %768 = vmatprep.subr.bf16.mxu0 0
  %769 = vmatpush1.bf16.msra.mxu0 0
  %770 = vmatprep.mubr.bf16.mxu0 0
  %771 = vmatmul.mubr.bf16.gmra.mrb[0].mxu0 %v558
  %v772 = vpop.f32.mrb[0].mxu0
  %v773 = vadd.f32 0.0, %v772
  %v774 = vpop.f32.mrb[0].mxu0
  %v775 = vpop.f32.mrb[0].mxu0
  %v776 = vpop.f32.mrb[0].mxu0
  %777 = vdwg.mxu0
  %779 = vrot.lane.b32.xlu0 %v773, 36
  %v780 = vpop.permute.xlu0 %779
  %vm782 = vcmask 293888
  %v783 = vsel %vm782, %v598, %v780
  %s784 = scalar_lea.vmem %s8, 8
  %v785 = vld [vmem:[%s784] sm:$0xff]
  %787 = vset.pattern.permute.xlu0 0
  %788 = vperm.xlu0 %787, %v785
  %v789 = vpop.permute.xlu0 %788
  %v791 = vadd.f32 %v783, %v789
  %v792 = vmax.f32 %v791, 0.0
  %v793 = vsel %vm556, %v792, 0.0
  %794 = vadd.xlane.f32.xlu0 %v793
  %v795 = vpop.xlane.xlu0 %794
  %v796 = vmul.f32 %v795, 0.013888889
  %v797 = vsub.f32 %v792, %v796
  %v798 = vmul.f32 %v797, %v797
  %v799 = vsel %vm556, %v798, 0.0
  %800 = vadd.xlane.f32.xlu0 %v799
  %v801 = vpop.xlane.xlu0 %800
  %v802 = vmul.f32 %v801, 0.013888889
  %v803 = vadd.f32 %v802, 1e-05
  %v804 = vrsqrt.pop %v803
  %v805 = vmul.f32 %v797, %v804
  %806 = vset.pattern.permute.xlu0 1
  %807 = vperm.xlu0 %806, %v785
  %v808 = vpop.permute.xlu0 %807
  %v810 = vmul.f32 %v805, %v808
  %811 = vset.pattern.permute.xlu0 2
  %812 = vperm.xlu0 %811, %v785
  %v813 = vpop.permute.xlu0 %812
  %v815 = vadd.f32 %v810, %v813
  %v816 = vld [vmem:[%s4] sm:$0xf]
  %v817 = vld [vmem:[%s4 + $0x4] sm:$0xf]
  %v818 = vld [vmem:[%s4 + $0x8] sm:$0xf]
  %v819 = vld [vmem:[%s4 + $0xc] sm:$0xf]
  %v820 = vld [vmem:[%s4 + $0x10] sm:$0x3]
  %v821 = vld [vmem:[%s5] sm:$0xf]
  %v822 = vpack.c.bf16 %v815, %v815
  %v828 = vunpack.c.l.b16 %v816
  %v829 = vunpack.c.l.b16 %v817
  %v830 = vunpack.c.l.b16 %v818
  %v831 = vunpack.c.l.b16 %v819
  %v832 = vunpack.c.l.b16 %v820
  %v833 = vpack.c.b16 %v829, %v828
  %v834 = vpack.c.b16 %v831, %v830
  %v835 = vpack.c.b16 %v832, %v832
  %v839 = vsel %vm782, %v822, 0
  %vm841 = vcmask 1041408
  %v843 = vsel %vm841, %v835, 0
  %845 = vmatprep.subr.bf16.mxu0 0
  %846 = vmatpush1.bf16.msra.mxu0 %v833
  %847 = vmatprep.subr.bf16.mxu0 0
  %848 = vmatpush1.bf16.msra.mxu0 %v834
  %849 = vmatprep.subr.bf16.mxu0 0
  %850 = vmatpush1.bf16.msra.mxu0 %v843
  %851 = vmatprep.subr.bf16.mxu0 0
  %852 = vmatpush1.bf16.msra.mxu0 0
  %853 = vmatprep.subr.bf16.mxu0 0
  %854 = vmatpush1.bf16.msra.mxu0 0
  %855 = vmatprep.subr.bf16.mxu0 0
  %856 = vmatpush1.bf16.msra.mxu0 0
  %857 = vmatprep.subr.bf16.mxu0 0
  %858 = vmatpush1.bf16.msra.mxu0 0
  %859 = vmatprep.subr.bf16.mxu0 0
  %860 = vmatpush1.bf16.msra.mxu0 0
  %861 = vmatprep.subr.bf16.mxu0 0
  %862 = vmatpush1.bf16.msra.mxu0 0
  %863 = vmatprep.subr.bf16.mxu0 0
  %864 = vmatpush1.bf16.msra.mxu0 0
  %865 = vmatprep.subr.bf16.mxu0 0
  %866 = vmatpush1.bf16.msra.mxu0 0
  %867 = vmatprep.subr.bf16.mxu0 0
  %868 = vmatpush1.bf16.msra.mxu0 0
  %869 = vmatprep.subr.bf16.mxu0 0
  %870 = vmatpush1.bf16.msra.mxu0 0
  %871 = vmatprep.subr.bf16.mxu0 0
  %872 = vmatpush1.bf16.msra.mxu0 0
  %873 = vmatprep.subr.bf16.mxu0 0
  %874 = vmatpush1.bf16.msra.mxu0 0
  %875 = vmatprep.subr.bf16.mxu0 0
  %876 = vmatpush1.bf16.msra.mxu0 0
  %877 = vmatprep.mubr.bf16.mxu0 0
  %878 = vmatmul.mubr.bf16.gmra.mrb[0].mxu0 %v839
  %v879 = vpop.f32.mrb[0].mxu0
  %v880 = vadd.f32 0.0, %v879
  %v881 = vpop.f32.mrb[0].mxu0
  %v882 = vpop.f32.mrb[0].mxu0
  %v883 = vpop.f32.mrb[0].mxu0
  %884 = vdwg.mxu0
  %886 = vrot.lane.b32.xlu0 %v880, 124
  %v887 = vpop.permute.xlu0 %886
  %889 = vrot.lane.b32.xlu0 %v880, 120
  %v890 = vpop.permute.xlu0 %889
  %892 = vrot.lane.b32.xlu0 %v880, 116
  %v893 = vpop.permute.xlu0 %892
  %895 = vrot.lane.b32.xlu0 %v880, 112
  %v896 = vpop.permute.xlu0 %895
  %898 = vrot.lane.b32.xlu0 %v880, 108
  %v899 = vpop.permute.xlu0 %898
  %901 = vrot.lane.b32.xlu0 %v880, 104
  %v902 = vpop.permute.xlu0 %901
  %904 = vrot.lane.b32.xlu0 %v880, 100
  %v905 = vpop.permute.xlu0 %904
  %907 = vrot.lane.b32.xlu0 %v880, 96
  %v908 = vpop.permute.xlu0 %907
  %v910 = vpack.c.bf16 %v887, %v880
  %v911 = vpack.c.bf16 %v893, %v890
  %v912 = vpack.c.bf16 %v899, %v896
  %v913 = vpack.c.bf16 %v905, %v902
  %v914 = vpack.c.bf16 %v908, %v908
  %v916 = vsel %vm556, %v821, 0
  %v919 = vsel %vm67, %v914, 0
  %921 = vmatprep.subr.bf16.mxu0 0
  %922 = vmatpush1.bf16.msra.mxu0 %v910
  %923 = vmatprep.subr.bf16.mxu0 0
  %924 = vmatpush1.bf16.msra.mxu0 %v911
  %925 = vmatprep.subr.bf16.mxu0 0
  %926 = vmatpush1.bf16.msra.mxu0 %v912
  %927 = vmatprep.subr.bf16.mxu0 0
  %928 = vmatpush1.bf16.msra.mxu0 %v913
  %929 = vmatprep.subr.bf16.mxu0 0
  %930 = vmatpush1.bf16.msra.mxu0 %v919
  %931 = vmatprep.subr.bf16.mxu0 0
  %932 = vmatpush1.bf16.msra.mxu0 0
  %933 = vmatprep.subr.bf16.mxu0 0
  %934 = vmatpush1.bf16.msra.mxu0 0
  %935 = vmatprep.subr.bf16.mxu0 0
  %936 = vmatpush1.bf16.msra.mxu0 0
  %937 = vmatprep.subr.bf16.mxu0 0
  %938 = vmatpush1.bf16.msra.mxu0 0
  %939 = vmatprep.subr.bf16.mxu0 0
  %940 = vmatpush1.bf16.msra.mxu0 0
  %941 = vmatprep.subr.bf16.mxu0 0
  %942 = vmatpush1.bf16.msra.mxu0 0
  %943 = vmatprep.subr.bf16.mxu0 0
  %944 = vmatpush1.bf16.msra.mxu0 0
  %945 = vmatprep.subr.bf16.mxu0 0
  %946 = vmatpush1.bf16.msra.mxu0 0
  %947 = vmatprep.subr.bf16.mxu0 0
  %948 = vmatpush1.bf16.msra.mxu0 0
  %949 = vmatprep.subr.bf16.mxu0 0
  %950 = vmatpush1.bf16.msra.mxu0 0
  %951 = vmatprep.subr.bf16.mxu0 0
  %952 = vmatpush1.bf16.msra.mxu0 0
  %953 = vmatprep.mubr.bf16.mxu0 0
  %954 = vmatmul.mubr.bf16.gmra.mrb[0].mxu0 %v916
  %v955 = vpop.f32.mrb[0].mxu0
  %v956 = vadd.f32 0.0, %v955
  %v957 = vpop.f32.mrb[0].mxu0
  %v958 = vpop.f32.mrb[0].mxu0
  %v959 = vpop.f32.mrb[0].mxu0
  %960 = vdwg.mxu0
  %962 = vrot.lane.b32.xlu0 %v822, 92
  %v963 = vpop.permute.xlu0 %962
  %v965 = vsel %vm782, %v963, 0
  %967 = vmatprep.subr.bf16.mxu0 0
  %968 = vmatpush1.bf16.msra.mxu0 %v833
  %969 = vmatprep.subr.bf16.mxu0 0
  %970 = vmatpush1.bf16.msra.mxu0 %v834
  %971 = vmatprep.subr.bf16.mxu0 0
  %972 = vmatpush1.bf16.msra.mxu0 %v843
  %973 = vmatprep.subr.bf16.mxu0 0
  %974 = vmatpush1.bf16.msra.mxu0 0
  %975 = vmatprep.subr.bf16.mxu0 0
  %976 = vmatpush1.bf16.msra.mxu0 0
  %977 = vmatprep.subr.bf16.mxu0 0
  %978 = vmatpush1.bf16.msra.mxu0 0
  %979 = vmatprep.subr.bf16.mxu0 0
  %980 = vmatpush1.bf16.msra.mxu0 0
  %981 = vmatprep.subr.bf16.mxu0 0
  %982 = vmatpush1.bf16.msra.mxu0 0
  %983 = vmatprep.subr.bf16.mxu0 0
  %984 = vmatpush1.bf16.msra.mxu0 0
  %985 = vmatprep.subr.bf16.mxu0 0
  %986 = vmatpush1.bf16.msra.mxu0 0
  %987 = vmatprep.subr.bf16.mxu0 0
  %988 = vmatpush1.bf16.msra.mxu0 0
  %989 = vmatprep.subr.bf16.mxu0 0
  %990 = vmatpush1.bf16.msra.mxu0 0
  %991 = vmatprep.subr.bf16.mxu0 0
  %992 = vmatpush1.bf16.msra.mxu0 0
  %993 = vmatprep.subr.bf16.mxu0 0
  %994 = vmatpush1.bf16.msra.mxu0 0
  %995 = vmatprep.subr.bf16.mxu0 0
  %996 = vmatpush1.bf16.msra.mxu0 0
  %997 = vmatprep.subr.bf16.mxu0 0
  %998 = vmatpush1.bf16.msra.mxu0 0
  %999 = vmatprep.mubr.bf16.mxu0 0
  %1000 = vmatmul.mubr.bf16.gmra.mrb[0].mxu0 %v965
  %v1001 = vpop.f32.mrb[0].mxu0
  %v1002 = vadd.f32 0.0, %v1001
  %v1003 = vpop.f32.mrb[0].mxu0
  %v1004 = vpop.f32.mrb[0].mxu0
  %v1005 = vpop.f32.mrb[0].mxu0
  %1006 = vdwg.mxu0
  %1008 = vrot.lane.b32.xlu0 %v1002, 124
  %v1009 = vpop.permute.xlu0 %1008
  %1011 = vrot.lane.b32.xlu0 %v1002, 120
  %v1012 = vpop.permute.xlu0 %1011
  %1014 = vrot.lane.b32.xlu0 %v1002, 116
  %v1015 = vpop.permute.xlu0 %1014
  %1017 = vrot.lane.b32.xlu0 %v1002, 112
  %v1018 = vpop.permute.xlu0 %1017
  %1020 = vrot.lane.b32.xlu0 %v1002, 108
  %v1021 = vpop.permute.xlu0 %1020
  %1023 = vrot.lane.b32.xlu0 %v1002, 104
  %v1024 = vpop.permute.xlu0 %1023
  %1026 = vrot.lane.b32.xlu0 %v1002, 100
  %v1027 = vpop.permute.xlu0 %1026
  %1029 = vrot.lane.b32.xlu0 %v1002, 96
  %v1030 = vpop.permute.xlu0 %1029
  %v1032 = vpack.c.bf16 %v1009, %v1002
  %v1033 = vpack.c.bf16 %v1015, %v1012
  %v1034 = vpack.c.bf16 %v1021, %v1018
  %v1035 = vpack.c.bf16 %v1027, %v1024
  %v1036 = vpack.c.bf16 %v1030, %v1030
  %v1038 = vsel %vm67, %v1036, 0
  %1040 = vmatprep.subr.bf16.mxu0 0
  %1041 = vmatpush1.bf16.msra.mxu0 %v1032
  %1042 = vmatprep.subr.bf16.mxu0 0
  %1043 = vmatpush1.bf16.msra.mxu0 %v1033
  %1044 = vmatprep.subr.bf16.mxu0 0
  %1045 = vmatpush1.bf16.msra.mxu0 %v1034
  %1046 = vmatprep.subr.bf16.mxu0 0
  %1047 = vmatpush1.bf16.msra.mxu0 %v1035
  %1048 = vmatprep.subr.bf16.mxu0 0
  %1049 = vmatpush1.bf16.msra.mxu0 %v1038
  %1050 = vmatprep.subr.bf16.mxu0 0
  %1051 = vmatpush1.bf16.msra.mxu0 0
  %1052 = vmatprep.subr.bf16.mxu0 0
  %1053 = vmatpush1.bf16.msra.mxu0 0
  %1054 = vmatprep.subr.bf16.mxu0 0
  %1055 = vmatpush1.bf16.msra.mxu0 0
  %1056 = vmatprep.subr.bf16.mxu0 0
  %1057 = vmatpush1.bf16.msra.mxu0 0
  %1058 = vmatprep.subr.bf16.mxu0 0
  %1059 = vmatpush1.bf16.msra.mxu0 0
  %1060 = vmatprep.subr.bf16.mxu0 0
  %1061 = vmatpush1.bf16.msra.mxu0 0
  %1062 = vmatprep.subr.bf16.mxu0 0
  %1063 = vmatpush1.bf16.msra.mxu0 0
  %1064 = vmatprep.subr.bf16.mxu0 0
  %1065 = vmatpush1.bf16.msra.mxu0 0
  %1066 = vmatprep.subr.bf16.mxu0 0
  %1067 = vmatpush1.bf16.msra.mxu0 0
  %1068 = vmatprep.subr.bf16.mxu0 0
  %1069 = vmatpush1.bf16.msra.mxu0 0
  %1070 = vmatprep.subr.bf16.mxu0 0
  %1071 = vmatpush1.bf16.msra.mxu0 0
  %1072 = vmatprep.mubr.bf16.mxu0 0
  %1073 = vmatmul.mubr.bf16.gmra.mrb[0].mxu0 %v916
  %v1074 = vpop.f32.mrb[0].mxu0
  %v1075 = vadd.f32 0.0, %v1074
  %v1076 = vpop.f32.mrb[0].mxu0
  %v1077 = vpop.f32.mrb[0].mxu0
  %v1078 = vpop.f32.mrb[0].mxu0
  %1079 = vdwg.mxu0
  %1081 = vrot.lane.b32.xlu0 %v1075, 4
  %v1082 = vpop.permute.xlu0 %1081
  %v1084 = vsel %vm545, %v956, %v1082
  %s1085 = scalar_lea.vmem %s8, 16
  %v1086 = vld [vmem:[%s1085] sm:$0xff]
  %1088 = vset.pattern.permute.xlu0 0
  %1089 = vperm.xlu0 %1088, %v1086
  %v1090 = vpop.permute.xlu0 %1089
  %v1092 = vadd.f32 %v1084, %v1090
  %v1093 = vmax.f32 %v1092, 0.0
  %vm1094 = vcmask 64512
  %v1095 = vsel %vm1094, %v1093, 0.0
  %1096 = vadd.xlane.f32.xlu0 %v1095
  %v1097 = vpop.xlane.xlu0 %1096
  %v1098 = vmul.f32 %v1097, 0.125
  %v1099 = vsub.f32 %v1093, %v1098
  %v1100 = vmul.f32 %v1099, %v1099
  %v1101 = vsel %vm1094, %v1100, 0.0
  %1102 = vadd.xlane.f32.xlu0 %v1101
  %v1103 = vpop.xlane.xlu0 %1102
  %v1104 = vmul.f32 %v1103, 0.125
  %v1105 = vadd.f32 %v1104, 1e-05
  %v1106 = vrsqrt.pop %v1105
  %v1107 = vmul.f32 %v1099, %v1106
  %1108 = vset.pattern.permute.xlu0 1
  %1109 = vperm.xlu0 %1108, %v1086
  %v1110 = vpop.permute.xlu0 %1109
  %v1112 = vmul.f32 %v1107, %v1110
  %1113 = vset.pattern.permute.xlu0 2
  %1114 = vperm.xlu0 %1113, %v1086
  %v1115 = vpop.permute.xlu0 %1114
  %v1117 = vadd.f32 %v1112, %v1115
  %v1118 = vld [vmem:[%s6] sm:$0x3]
  %v1119 = vld [vmem:[%s7] sm:$0xf]
  %v1120 = vpack.c.bf16 %v1117, %v1117
  %v1122 = vsel %vm545, %v1120, 0
  %v1125 = vsel %vm841, %v1118, 0
  %1127 = vmatprep.subr.bf16.mxu0 0
  %1128 = vmatpush1.bf16.msra.mxu0 %v1125
  %1129 = vmatprep.subr.bf16.mxu0 0
  %1130 = vmatpush1.bf16.msra.mxu0 0
  %1131 = vmatprep.subr.bf16.mxu0 0
  %1132 = vmatpush1.bf16.msra.mxu0 0
  %1133 = vmatprep.subr.bf16.mxu0 0
  %1134 = vmatpush1.bf16.msra.mxu0 0
  %1135 = vmatprep.subr.bf16.mxu0 0
  %1136 = vmatpush1.bf16.msra.mxu0 0
  %1137 = vmatprep.subr.bf16.mxu0 0
  %1138 = vmatpush1.bf16.msra.mxu0 0
  %1139 = vmatprep.subr.bf16.mxu0 0
  %1140 = vmatpush1.bf16.msra.mxu0 0
  %1141 = vmatprep.subr.bf16.mxu0 0
  %1142 = vmatpush1.bf16.msra.mxu0 0
  %1143 = vmatprep.subr.bf16.mxu0 0
  %1144 = vmatpush1.bf16.msra.mxu0 0
  %1145 = vmatprep.subr.bf16.mxu0 0
  %1146 = vmatpush1.bf16.msra.mxu0 0
  %1147 = vmatprep.subr.bf16.mxu0 0
  %1148 = vmatpush1.bf16.msra.mxu0 0
  %1149 = vmatprep.subr.bf16.mxu0 0
  %1150 = vmatpush1.bf16.msra.mxu0 0
  %1151 = vmatprep.subr.bf16.mxu0 0
  %1152 = vmatpush1.bf16.msra.mxu0 0
  %1153 = vmatprep.subr.bf16.mxu0 0
  %1154 = vmatpush1.bf16.msra.mxu0 0
  %1155 = vmatprep.subr.bf16.mxu0 0
  %1156 = vmatpush1.bf16.msra.mxu0 0
  %1157 = vmatprep.subr.bf16.mxu0 0
  %1158 = vmatpush1.bf16.msra.mxu0 0
  %1159 = vmatprep.mubr.bf16.mxu0 0
  %1160 = vmatmul.mubr.bf16.gmra.mrb[0].mxu0 %v1122
  %v1161 = vpop.f32.mrb[0].mxu0
  %v1162 = vadd.f32 0.0, %v1161
  %v1163 = vpop.f32.mrb[0].mxu0
  %v1164 = vpop.f32.mrb[0].mxu0
  %v1165 = vpop.f32.mrb[0].mxu0
  %1166 = vdwg.mxu0
  %1168 = vrot.lane.b32.xlu0 %v1162, 127
  %v1169 = vpop.permute.xlu0 %1168
  %1171 = vrot.lane.b32.xlu0 %v1162, 126
  %v1172 = vpop.permute.xlu0 %1171
  %1174 = vrot.lane.b32.xlu0 %v1162, 125
  %v1175 = vpop.permute.xlu0 %1174
  %v1177 = vpack.c.bf16 %v1169, %v1162
  %v1178 = vpack.c.bf16 %v1175, %v1172
  %vm1179 = vcmask 261120
  %v1181 = vsel %vm1179, %v1119, 0
  %1183 = vmatprep.subr.bf16.mxu0 0
  %1184 = vmatpush1.bf16.msra.mxu0 %v1177
  %1185 = vmatprep.subr.bf16.mxu0 0
  %1186 = vmatpush1.bf16.msra.mxu0 %v1178
  %1187 = vmatprep.subr.bf16.mxu0 0
  %1188 = vmatpush1.bf16.msra.mxu0 0
  %1189 = vmatprep.subr.bf16.mxu0 0
  %1190 = vmatpush1.bf16.msra.mxu0 0
  %1191 = vmatprep.subr.bf16.mxu0 0
  %1192 = vmatpush1.bf16.msra.mxu0 0
  %1193 = vmatprep.subr.bf16.mxu0 0
  %1194 = vmatpush1.bf16.msra.mxu0 0
  %1195 = vmatprep.subr.bf16.mxu0 0
  %1196 = vmatpush1.bf16.msra.mxu0 0
  %1197 = vmatprep.subr.bf16.mxu0 0
  %1198 = vmatpush1.bf16.msra.mxu0 0
  %1199 = vmatprep.subr.bf16.mxu0 0
  %1200 = vmatpush1.bf16.msra.mxu0 0
  %1201 = vmatprep.subr.bf16.mxu0 0
  %1202 = vmatpush1.bf16.msra.mxu0 0
  %1203 = vmatprep.subr.bf16.mxu0 0
  %1204 = vmatpush1.bf16.msra.mxu0 0
  %1205 = vmatprep.subr.bf16.mxu0 0
  %1206 = vmatpush1.bf16.msra.mxu0 0
  %1207 = vmatprep.subr.bf16.mxu0 0
  %1208 = vmatpush1.bf16.msra.mxu0 0
  %1209 = vmatprep.subr.bf16.mxu0 0
  %1210 = vmatpush1.bf16.msra.mxu0 0
  %1211 = vmatprep.subr.bf16.mxu0 0
  %1212 = vmatpush1.bf16.msra.mxu0 0
  %1213 = vmatprep.subr.bf16.mxu0 0
  %1214 = vmatpush1.bf16.msra.mxu0 0
  %1215 = vmatprep.mubr.bf16.mxu0 0
  %1216 = vmatmul.mubr.bf16.gmra.mrb[0].mxu0 %v1181
  %v1217 = vpop.f32.mrb[0].mxu0
  %v1218 = vadd.f32 0.0, %v1217
  %v1219 = vpop.f32.mrb[0].mxu0
  %v1220 = vpop.f32.mrb[0].mxu0
  %v1221 = vpop.f32.mrb[0].mxu0
  %1222 = vdwg.mxu0
  %1224 = vrot.lane.b32.xlu0 %v1120, 124
  %v1225 = vpop.permute.xlu0 %1224
  %v1227 = vsel %vm545, %v1225, 0
  %1229 = vmatprep.subr.bf16.mxu0 0
  %1230 = vmatpush1.bf16.msra.mxu0 %v1125
  %1231 = vmatprep.subr.bf16.mxu0 0
  %1232 = vmatpush1.bf16.msra.mxu0 0
  %1233 = vmatprep.subr.bf16.mxu0 0
  %1234 = vmatpush1.bf16.msra.mxu0 0
  %1235 = vmatprep.subr.bf16.mxu0 0
  %1236 = vmatpush1.bf16.msra.mxu0 0
  %1237 = vmatprep.subr.bf16.mxu0 0
  %1238 = vmatpush1.bf16.msra.mxu0 0
  %1239 = vmatprep.subr.bf16.mxu0 0
  %1240 = vmatpush1.bf16.msra.mxu0 0
  %1241 = vmatprep.subr.bf16.mxu0 0
  %1242 = vmatpush1.bf16.msra.mxu0 0
  %1243 = vmatprep.subr.bf16.mxu0 0
  %1244 = vmatpush1.bf16.msra.mxu0 0
  %1245 = vmatprep.subr.bf16.mxu0 0
  %1246 = vmatpush1.bf16.msra.mxu0 0
  %1247 = vmatprep.subr.bf16.mxu0 0
  %1248 = vmatpush1.bf16.msra.mxu0 0
  %1249 = vmatprep.subr.bf16.mxu0 0
  %1250 = vmatpush1.bf16.msra.mxu0 0
  %1251 = vmatprep.subr.bf16.mxu0 0
  %1252 = vmatpush1.bf16.msra.mxu0 0
  %1253 = vmatprep.subr.bf16.mxu0 0
  %1254 = vmatpush1.bf16.msra.mxu0 0
  %1255 = vmatprep.subr.bf16.mxu0 0
  %1256 = vmatpush1.bf16.msra.mxu0 0
  %1257 = vmatprep.subr.bf16.mxu0 0
  %1258 = vmatpush1.bf16.msra.mxu0 0
  %1259 = vmatprep.subr.bf16.mxu0 0
  %1260 = vmatpush1.bf16.msra.mxu0 0
  %1261 = vmatprep.mubr.bf16.mxu0 0
  %1262 = vmatmul.mubr.bf16.gmra.mrb[0].mxu0 %v1227
  %v1263 = vpop.f32.mrb[0].mxu0
  %v1264 = vadd.f32 0.0, %v1263
  %v1265 = vpop.f32.mrb[0].mxu0
  %v1266 = vpop.f32.mrb[0].mxu0
  %v1267 = vpop.f32.mrb[0].mxu0
  %1268 = vdwg.mxu0
  %1270 = vrot.lane.b32.xlu0 %v1264, 127
  %v1271 = vpop.permute.xlu0 %1270
  %1273 = vrot.lane.b32.xlu0 %v1264, 126
  %v1274 = vpop.permute.xlu0 %1273
  %1276 = vrot.lane.b32.xlu0 %v1264, 125
  %v1277 = vpop.permute.xlu0 %1276
  %v1279 = vpack.c.bf16 %v1271, %v1264
  %v1280 = vpack.c.bf16 %v1277, %v1274
  %1281 = vmatprep.subr.bf16.mxu0 0
  %1282 = vmatpush1.bf16.msra.mxu0 %v1279
  %1283 = vmatprep.subr.bf16.mxu0 0
  %1284 = vmatpush1.bf16.msra.mxu0 %v1280
  %1285 = vmatprep.subr.bf16.mxu0 0
  %1286 = vmatpush1.bf16.msra.mxu0 0
  %1287 = vmatprep.subr.bf16.mxu0 0
  %1288 = vmatpush1.bf16.msra.mxu0 0
  %1289 = vmatprep.subr.bf16.mxu0 0
  %1290 = vmatpush1.bf16.msra.mxu0 0
  %1291 = vmatprep.subr.bf16.mxu0 0
  %1292 = vmatpush1.bf16.msra.mxu0 0
  %1293 = vmatprep.subr.bf16.mxu0 0
  %1294 = vmatpush1.bf16.msra.mxu0 0
  %1295 = vmatprep.subr.bf16.mxu0 0
  %1296 = vmatpush1.bf16.msra.mxu0 0
  %1297 = vmatprep.subr.bf16.mxu0 0
  %1298 = vmatpush1.bf16.msra.mxu0 0
  %1299 = vmatprep.subr.bf16.mxu0 0
  %1300 = vmatpush1.bf16.msra.mxu0 0
  %1301 = vmatprep.subr.bf16.mxu0 0
  %1302 = vmatpush1.bf16.msra.mxu0 0
  %1303 = vmatprep.subr.bf16.mxu0 0
  %1304 = vmatpush1.bf16.msra.mxu0 0
  %1305 = vmatprep.subr.bf16.mxu0 0
  %1306 = vmatpush1.bf16.msra.mxu0 0
  %1307 = vmatprep.subr.bf16.mxu0 0
  %1308 = vmatpush1.bf16.msra.mxu0 0
  %1309 = vmatprep.subr.bf16.mxu0 0
  %1310 = vmatpush1.bf16.msra.mxu0 0
  %1311 = vmatprep.subr.bf16.mxu0 0
  %1312 = vmatpush1.bf16.msra.mxu0 0
  %1313 = vmatprep.mubr.bf16.mxu0 0
  %1314 = vmatmul.mubr.bf16.gmra.mrb[0].mxu0 %v1181
  %v1315 = vpop.f32.mrb[0].mxu0
  %v1316 = vadd.f32 0.0, %v1315
  %v1317 = vpop.f32.mrb[0].mxu0
  %v1318 = vpop.f32.mrb[0].mxu0
  %v1319 = vpop.f32.mrb[0].mxu0
  %1320 = vdwg.mxu0
  %1322 = vrot.lane.b32.xlu0 %v1316, 1
  %v1323 = vpop.permute.xlu0 %1322
  %vm1325 = vcmask 7168
  %v1326 = vsel %vm1325, %v1218, %v1323
  %s1327 = scalar_lea.vmem %s8, 24
  %v1328 = vld [vmem:[%s1327] sm:$0xff]
  %1330 = vset.pattern.permute.xlu0 0
  %1331 = vperm.xlu0 %1330, %v1328
  %v1332 = vpop.permute.xlu0 %1331
  %v1334 = vadd.f32 %v1326, %v1332
  %v1335 = vmax.f32 %v1334, 0.0
  %vm1336 = vcmask 15360
  %v1337 = vsel %vm1336, %v1335, 0.0
  %1338 = vadd.xlane.f32.xlu0 %v1337
  %v1339 = vpop.xlane.xlu0 %1338
  %v1340 = vmul.f32 %v1339, 0.5
  %v1341 = vsub.f32 %v1335, %v1340
  %v1342 = vmul.f32 %v1341, %v1341
  %v1343 = vsel %vm1336, %v1342, 0.0
  %1344 = vadd.xlane.f32.xlu0 %v1343
  %v1345 = vpop.xlane.xlu0 %1344
  %v1346 = vmul.f32 %v1345, 0.5
  %v1347 = vadd.f32 %v1346, 1e-05
  %v1348 = vrsqrt.pop %v1347
  %v1349 = vmul.f32 %v1341, %v1348
  %1350 = vset.pattern.permute.xlu0 1
  %1351 = vperm.xlu0 %1350, %v1328
  %v1352 = vpop.permute.xlu0 %1351
  %v1354 = vmul.f32 %v1349, %v1352
  %1355 = vset.pattern.permute.xlu0 2
  %1356 = vperm.xlu0 %1355, %v1328
  %v1357 = vpop.permute.xlu0 %1356
  %v1359 = vadd.f32 %v1354, %v1357
  %v1360 = vld [vmem:[%s9] sm:$0x7]
  %v1361 = vpack.c.bf16 %v1359, %v1359
  %v1362 = vld [vmem:[%s10] sm:$0x1f]
  %1364 = vset.pattern.permute.xlu0 0
  %1365 = vperm.xlu0 %1364, %v1362
  %v1366 = vpop.permute.xlu0 %1365
  %v1369 = vsel %vm1094, %v1360, 0
  %v1372 = vsel %vm67, %v1361, 0
  %1374 = vmatprep.subr.bf16.mxu0 0
  %1375 = vmatpush1.bf16.msra.mxu0 %v1372
  %1376 = vmatprep.subr.bf16.mxu0 0
  %1377 = vmatpush1.bf16.msra.mxu0 0
  %1378 = vmatprep.subr.bf16.mxu0 0
  %1379 = vmatpush1.bf16.msra.mxu0 0
  %1380 = vmatprep.subr.bf16.mxu0 0
  %1381 = vmatpush1.bf16.msra.mxu0 0
  %1382 = vmatprep.subr.bf16.mxu0 0
  %1383 = vmatpush1.bf16.msra.mxu0 0
  %1384 = vmatprep.subr.bf16.mxu0 0
  %1385 = vmatpush1.bf16.msra.mxu0 0
  %1386 = vmatprep.subr.bf16.mxu0 0
  %1387 = vmatpush1.bf16.msra.mxu0 0
  %1388 = vmatprep.subr.bf16.mxu0 0
  %1389 = vmatpush1.bf16.msra.mxu0 0
  %1390 = vmatprep.subr.bf16.mxu0 0
  %1391 = vmatpush1.bf16.msra.mxu0 0
  %1392 = vmatprep.subr.bf16.mxu0 0
  %1393 = vmatpush1.bf16.msra.mxu0 0
  %1394 = vmatprep.subr.bf16.mxu0 0
  %1395 = vmatpush1.bf16.msra.mxu0 0
  %1396 = vmatprep.subr.bf16.mxu0 0
  %1397 = vmatpush1.bf16.msra.mxu0 0
  %1398 = vmatprep.subr.bf16.mxu0 0
  %1399 = vmatpush1.bf16.msra.mxu0 0
  %1400 = vmatprep.subr.bf16.mxu0 0
  %1401 = vmatpush1.bf16.msra.mxu0 0
  %1402 = vmatprep.subr.bf16.mxu0 0
  %1403 = vmatpush1.bf16.msra.mxu0 0
  %1404 = vmatprep.subr.bf16.mxu0 0
  %1405 = vmatpush1.bf16.msra.mxu0 0
  %1406 = vmatprep.mubr.bf16.mxu0 0
  %1407 = vmatmul.mubr.bf16.gmra.mrb[0].mxu0 %v1369
  %v1408 = vpop.f32.mrb[0].mxu0
  %v1409 = vadd.f32 %v1366, %v1408
  %v1410 = vpop.f32.mrb[0].mxu0
  %v1411 = vpop.f32.mrb[0].mxu0
  %v1412 = vpop.f32.mrb[0].mxu0
  %1413 = vdwg.mxu0
  %vm1414 = vcmask 12288
  %1415 = vst.msk [vmem:[%s11] sm:$0x1f] %vm1414, %v1409
  // Predicated region
  $region46: #{forward.1} parent=0 // pred_check
    _
  $region47: #{forward.1} parent=0 // pred_check_branch
    %1417 = sbr.rel (0) target = $region49
  $region48: #{forward.1} parent=0 // pred_region
    _
  $region49: #{forward.1} parent=0 // pred_fallthru
    _
  // Predicated region
  $region50: #{forward.1} parent=0 // pred_check
    _
  $region51: #{forward.1} parent=0 // pred_check_branch
    %1419 = sbr.rel (0) target = $region53
  $region52: #{forward.1} parent=0 // pred_region
    _
  $region53: #{forward.1} parent=0 // pred_fallthru
    _

</llo_original>
